<compile_context>
chip_gen: v5e
topology: v5e:2x2
jax: 0.10.0
libtpu: 0.0.40
codegen_flags: <defaults>
</compile_context>

<pallas_src>
import jax
import jax.numpy as jnp
from jax.experimental import pallas as pl
from jax.experimental.pallas import tpu as pltpu

KSIZE = 30            # Conv1d kernel size
POOL = 5              # MaxPool1d stride (kernel_size=1 -> subsampling)
FEAT = 234            # Linear in_features
L_USED = 6000         # usable length implied by Linear(234, 5)
NPHASE0 = POOL * POOL   # 25 input phases
NPHASE1 = POOL          # 5 pooled1 phases
XPH_LEN = L_USED // NPHASE0   # 240 elements per input phase
XPH_PAD = 256                 # lane-padded phase length (multiple of 128)
P1PH_LEN = 240                # computed pooled1-phase length (valid: 0..238)
QTAPS = KSIZE // POOL         # 6


def _convnet_kernel(w1_ref, b1_ref, w2_ref, b2_ref, x25_ref, woutT_ref, bout_ref,
                    logits_ref, p1_ref):
    """conv1+relu+pool1 -> conv2+relu+pool2 -> linear, for one batch tile.

    Polyphase layout: x25_ref[t, n, m] = x[n, 25*m + t], t = 0..24.
    Stage 1 writes pooled1 phase-major: p1_ref[r, n, m] = pooled1[n, 5*m + r],
    so both stages only read contiguous lane slices (no strided gathers).
    """
    tb = x25_ref.shape[1]

    # ---- Stage 1: Conv1d(1,1,30) + ReLU + MaxPool1d(1,5), 25-phase form ----
    # p1_phase[r][m] = relu(b1 + sum_{q,s} w1[5q+s] *
    #                       x25[5*((r+q)%5)+s][m + (r+q)//5])
    acc1 = [jnp.full((tb, P1PH_LEN), b1_ref[0], dtype=jnp.float32)
            for _ in range(NPHASE1)]            # 5 independent accumulators
    for q in range(QTAPS):
        for s in range(POOL):
            # Hoist the tap-weight broadcast once; reused by all 5 phases.
            wvec = jnp.full((tb, P1PH_LEN), w1_ref[POOL * q + s],
                            dtype=jnp.float32)
            for r in range(NPHASE1):
                t = POOL * ((r + q) % POOL) + s
                c = (r + q) // POOL                      # 0 or 1 (lane offset)
                acc1[r] = acc1[r] + wvec * x25_ref[t, :, pl.ds(c, P1PH_LEN)]
    for r in range(NPHASE1):
        # Lane 239 is computed from the zero pad and is never read by stage 2.
        p1_ref[r, :, 0:P1PH_LEN] = jnp.maximum(acc1[r], 0.0)

    # ---- Stage 2: Conv1d(1,1,30) + ReLU + MaxPool1d(1,5) ----
    # pooled2[u] = relu(b2 + sum_{q,r} w2[5q+r] * p1_phase[r][u+q]), u = 0..233
    parts = []
    for q in range(QTAPS):                               # 6 independent partials
        pq = None
        for r in range(NPHASE1):
            term = w2_ref[POOL * q + r] * p1_ref[r, :, pl.ds(q, FEAT)]
            pq = term if pq is None else pq + term
        parts.append(pq)
    acc2 = (parts[0] + parts[1]) + (parts[2] + parts[3]) + (parts[4] + parts[5])
    h = jnp.maximum(acc2 + b2_ref[0], 0.0)               # (tb, 234)

    # ---- Linear(234, 5) (MXU; trivial at this size, scales with batch tile) --
    logits_ref[...] = (
        jnp.dot(h, woutT_ref[...], preferred_element_type=jnp.float32)
        + bout_ref[...])


def _softmax_dim0_kernel(z_ref, o_ref):
    # torch.nn.Softmax() implicit dim for 3-D input is dim=0 (batch axis), so
    # this must see the whole batch -> separate, un-tiled pass.
    z = z_ref[...]
    m = jnp.max(z, axis=0, keepdims=True)
    e = jnp.exp(z - m)
    o_ref[...] = e / jnp.sum(e, axis=0, keepdims=True)


def net_forward(x, params, *, batch_tile=128):
    """x: (N, 1, L) float32, PyTorch NCL, L >= 6000. Returns (N, 1, 5)."""
    w1, b1, w2, b2, wout, bout = params
    n, ch, length = x.shape
    assert ch == 1
    assert length >= L_USED, "Linear(234, 5) implies an input length >= 6000"
    assert wout.shape == (5, FEAT) and bout.shape == (5,)
    assert batch_tile % 8 == 0

    x2 = x.reshape(n, length)[:, :L_USED].astype(jnp.float32)

    # Polyphase-by-25 de-interleave (single cheap XLA transpose outside kernel):
    #   x25[t, b, m] = x[b, 25*m + t]
    x25 = jnp.transpose(x2.reshape(n, XPH_LEN, NPHASE0), (2, 0, 1))  # (25,N,240)

    # Batch tiling: tb == n (full dim) for small batches, else a multiple of 8.
    tb = n if n <= batch_tile else batch_tile
    n_pad = ((n + tb - 1) // tb) * tb
    # Pad batch to a multiple of tb and lanes to 256 (zeros; padded rows are
    # sliced off before softmax, padded lanes feed only the never-read m=239).
    x25 = jnp.pad(x25, ((0, 0), (0, n_pad - n), (0, XPH_PAD - XPH_LEN)))

    logits_pad = pl.pallas_call(
        _convnet_kernel,
        out_shape=jax.ShapeDtypeStruct((n_pad, 5), jnp.float32),
        grid=(n_pad // tb,),
        in_specs=[
            pl.BlockSpec(memory_space=pltpu.MemorySpace.SMEM),   # w1   (30,)
            pl.BlockSpec(memory_space=pltpu.MemorySpace.SMEM),   # b1   (1,)
            pl.BlockSpec(memory_space=pltpu.MemorySpace.SMEM),   # w2   (30,)
            pl.BlockSpec(memory_space=pltpu.MemorySpace.SMEM),   # b2   (1,)
            pl.BlockSpec((NPHASE0, tb, XPH_PAD),                 # x25  (25,N,256)
                         lambda i: (0, i, 0)),
            pl.BlockSpec(memory_space=pltpu.MemorySpace.VMEM),   # wout.T (234,5)
            pl.BlockSpec(memory_space=pltpu.MemorySpace.VMEM),   # bout   (1,5)
        ],
        out_specs=pl.BlockSpec((tb, 5), lambda i: (i, 0)),
        scratch_shapes=[pltpu.VMEM((NPHASE1, tb, XPH_PAD), jnp.float32)],
        compiler_params=pltpu.CompilerParams(
            dimension_semantics=("parallel",),
            vmem_limit_bytes=32 * 1024 * 1024),
    )(w1.astype(jnp.float32), b1.astype(jnp.float32),
      w2.astype(jnp.float32), b2.astype(jnp.float32),
      x25, wout.T.astype(jnp.float32),
      bout.reshape(1, 5).astype(jnp.float32))

    logits = logits_pad[:n]                      # drop padded batch rows

    probs = pl.pallas_call(
        _softmax_dim0_kernel,
        out_shape=jax.ShapeDtypeStruct((n, 5), jnp.float32),
        in_specs=[pl.BlockSpec(memory_space=pltpu.MemorySpace.VMEM)],
        out_specs=pl.BlockSpec(memory_space=pltpu.MemorySpace.VMEM),
    )(logits)

    return probs.reshape(n, 1, 5)


def reference_forward(x, params):
    """Pure-JAX reference mirroring the PyTorch forward."""
    w1, b1, w2, b2, wout, bout = params

    def conv_relu_pool(v, w, b):
        lo = v.shape[1] - (KSIZE - 1)
        out = b[0] + sum(w[k] * v[:, k:k + lo] for k in range(KSIZE))
        out = jnp.maximum(out, 0.0)
        return out[:, ::POOL]

    h = conv_relu_pool(x[:, 0, :], w1, b1)
    h = conv_relu_pool(h, w2, b2)
    logits = h @ wout.T + bout
    sm = jax.nn.softmax(logits, axis=0)   # torch Softmax() implicit dim=0 (3-D)
    return sm.reshape(x.shape[0], 1, -1)


if __name__ == "__main__":
    key = jax.random.PRNGKey(0)
    kx, k1, k2, k3, k4, k5, k6 = jax.random.split(key, 7)

    # Linear(234, 5) forces the sequence length: 6000 -> 5971 -> 1195 -> 1166 -> 234
    N, L = 2, 6000
    x = jax.random.normal(kx, (N, 1, L), jnp.float32)

    # Deterministic synthetic parameters (same shapes as the torch module).
    w1 = jax.random.normal(k1, (KSIZE,), jnp.float32) * 0.1
    b1 = jax.random.normal(k2, (1,), jnp.float32) * 0.1
    w2 = jax.random.normal(k3, (KSIZE,), jnp.float32) * 0.1
    b2 = jax.random.normal(k4, (1,), jnp.float32) * 0.1
    wout = jax.random.normal(k5, (5, FEAT), jnp.float32) * 0.05
    bout = jax.random.normal(k6, (5,), jnp.float32) * 0.05
    params = (w1, b1, w2, b2, wout, bout)

    out = jax.block_until_ready(net_forward(x, params))
    ref = jax.block_until_ready(reference_forward(x, params))
    assert out.shape == (N, 1, 5), out.shape
    if not jnp.allclose(out, ref, atol=1e-5, rtol=1e-5):
        raise AssertionError("Pallas kernel output mismatch vs JAX reference")
    print("KERNEL_OK")
</pallas_src>

<mosaic_0001>
module attributes {stable_mosaic.version = 11 : i64} {
  func.func @_convnet_kernel(%arg0: i32, %arg1: memref<30xf32, #tpu.memory_space<smem>>, %arg2: memref<1xf32, #tpu.memory_space<smem>>, %arg3: memref<30xf32, #tpu.memory_space<smem>>, %arg4: memref<1xf32, #tpu.memory_space<smem>>, %arg5: memref<25x2x256xf32, #tpu.memory_space<vmem>>, %arg6: memref<234x5xf32, #tpu.memory_space<vmem>>, %arg7: memref<1x5xf32, #tpu.memory_space<vmem>>, %arg8: memref<2x5xf32, #tpu.memory_space<vmem>>, %arg9: memref<5x2x256xf32, #tpu.memory_space<vmem>>) attributes {dimension_semantics = [#tpu.dimension_semantics<parallel>], iteration_bounds = array<i64: 1>, scalar_prefetch = 0 : i64, scratch_operands = 1 : i64, tpu.core_type = #tpu.core_type<tc>, window_params = [{transform_indices = @transform_0, window_bounds = array<i64: 30>}, {transform_indices = @transform_1, window_bounds = array<i64: 1>}, {transform_indices = @transform_2, window_bounds = array<i64: 30>}, {transform_indices = @transform_3, window_bounds = array<i64: 1>}, {transform_indices = @transform_4, window_bounds = array<i64: 25, 2, 256>}, {pipeline_mode = #tpu.pipeline_mode<synchronous>, transform_indices = @transform_5, window_bounds = array<i64: 234, 5>}, {pipeline_mode = #tpu.pipeline_mode<synchronous>, transform_indices = @transform_6, window_bounds = array<i64: 1, 5>}, {transform_indices = @transform_7, window_bounds = array<i64: 2, 5>}]} {
    %c0 = arith.constant 0 : index
    %0 = memref.load %arg2[%c0] : memref<1xf32, #tpu.memory_space<smem>>
    %1 = vector.broadcast %0 : f32 to vector<2x240xf32>
    %c0_0 = arith.constant 0 : index
    %2 = memref.load %arg2[%c0_0] : memref<1xf32, #tpu.memory_space<smem>>
    %3 = vector.broadcast %2 : f32 to vector<2x240xf32>
    %c0_1 = arith.constant 0 : index
    %4 = memref.load %arg2[%c0_1] : memref<1xf32, #tpu.memory_space<smem>>
    %5 = vector.broadcast %4 : f32 to vector<2x240xf32>
    %c0_2 = arith.constant 0 : index
    %6 = memref.load %arg2[%c0_2] : memref<1xf32, #tpu.memory_space<smem>>
    %7 = vector.broadcast %6 : f32 to vector<2x240xf32>
    %c0_3 = arith.constant 0 : index
    %8 = memref.load %arg2[%c0_3] : memref<1xf32, #tpu.memory_space<smem>>
    %9 = vector.broadcast %8 : f32 to vector<2x240xf32>
    %c0_4 = arith.constant 0 : index
    %10 = memref.load %arg1[%c0_4] : memref<30xf32, #tpu.memory_space<smem>>
    %11 = vector.broadcast %10 : f32 to vector<2x240xf32>
    %c0_5 = arith.constant 0 : index
    %c0_6 = arith.constant 0 : index
    %c0_7 = arith.constant 0 : index
    %12 = vector.load %arg5[%c0_5, %c0_6, %c0_7] : memref<25x2x256xf32, #tpu.memory_space<vmem>>, vector<1x2x240xf32>
    %13 = vector.shape_cast %12 : vector<1x2x240xf32> to vector<2x240xf32>
    %14 = arith.mulf %11, %13 : vector<2x240xf32>
    %15 = arith.addf %1, %14 : vector<2x240xf32>
    %c5 = arith.constant 5 : index
    %c0_8 = arith.constant 0 : index
    %c0_9 = arith.constant 0 : index
    %16 = vector.load %arg5[%c5, %c0_8, %c0_9] : memref<25x2x256xf32, #tpu.memory_space<vmem>>, vector<1x2x240xf32>
    %17 = vector.shape_cast %16 : vector<1x2x240xf32> to vector<2x240xf32>
    %18 = arith.mulf %11, %17 : vector<2x240xf32>
    %19 = arith.addf %3, %18 : vector<2x240xf32>
    %c10 = arith.constant 10 : index
    %c0_10 = arith.constant 0 : index
    %c0_11 = arith.constant 0 : index
    %20 = vector.load %arg5[%c10, %c0_10, %c0_11] : memref<25x2x256xf32, #tpu.memory_space<vmem>>, vector<1x2x240xf32>
    %21 = vector.shape_cast %20 : vector<1x2x240xf32> to vector<2x240xf32>
    %22 = arith.mulf %11, %21 : vector<2x240xf32>
    %23 = arith.addf %5, %22 : vector<2x240xf32>
    %c15 = arith.constant 15 : index
    %c0_12 = arith.constant 0 : index
    %c0_13 = arith.constant 0 : index
    %24 = vector.load %arg5[%c15, %c0_12, %c0_13] : memref<25x2x256xf32, #tpu.memory_space<vmem>>, vector<1x2x240xf32>
    %25 = vector.shape_cast %24 : vector<1x2x240xf32> to vector<2x240xf32>
    %26 = arith.mulf %11, %25 : vector<2x240xf32>
    %27 = arith.addf %7, %26 : vector<2x240xf32>
    %c20 = arith.constant 20 : index
    %c0_14 = arith.constant 0 : index
    %c0_15 = arith.constant 0 : index
    %28 = vector.load %arg5[%c20, %c0_14, %c0_15] : memref<25x2x256xf32, #tpu.memory_space<vmem>>, vector<1x2x240xf32>
    %29 = vector.shape_cast %28 : vector<1x2x240xf32> to vector<2x240xf32>
    %30 = arith.mulf %11, %29 : vector<2x240xf32>
    %31 = arith.addf %9, %30 : vector<2x240xf32>
    %c1 = arith.constant 1 : index
    %32 = memref.load %arg1[%c1] : memref<30xf32, #tpu.memory_space<smem>>
    %33 = vector.broadcast %32 : f32 to vector<2x240xf32>
    %c1_16 = arith.constant 1 : index
    %c0_17 = arith.constant 0 : index
    %c0_18 = arith.constant 0 : index
    %34 = vector.load %arg5[%c1_16, %c0_17, %c0_18] : memref<25x2x256xf32, #tpu.memory_space<vmem>>, vector<1x2x240xf32>
    %35 = vector.shape_cast %34 : vector<1x2x240xf32> to vector<2x240xf32>
    %36 = arith.mulf %33, %35 : vector<2x240xf32>
    %37 = arith.addf %15, %36 : vector<2x240xf32>
    %c6 = arith.constant 6 : index
    %c0_19 = arith.constant 0 : index
    %c0_20 = arith.constant 0 : index
    %38 = vector.load %arg5[%c6, %c0_19, %c0_20] : memref<25x2x256xf32, #tpu.memory_space<vmem>>, vector<1x2x240xf32>
    %39 = vector.shape_cast %38 : vector<1x2x240xf32> to vector<2x240xf32>
    %40 = arith.mulf %33, %39 : vector<2x240xf32>
    %41 = arith.addf %19, %40 : vector<2x240xf32>
    %c11 = arith.constant 11 : index
    %c0_21 = arith.constant 0 : index
    %c0_22 = arith.constant 0 : index
    %42 = vector.load %arg5[%c11, %c0_21, %c0_22] : memref<25x2x256xf32, #tpu.memory_space<vmem>>, vector<1x2x240xf32>
    %43 = vector.shape_cast %42 : vector<1x2x240xf32> to vector<2x240xf32>
    %44 = arith.mulf %33, %43 : vector<2x240xf32>
    %45 = arith.addf %23, %44 : vector<2x240xf32>
    %c16 = arith.constant 16 : index
    %c0_23 = arith.constant 0 : index
    %c0_24 = arith.constant 0 : index
    %46 = vector.load %arg5[%c16, %c0_23, %c0_24] : memref<25x2x256xf32, #tpu.memory_space<vmem>>, vector<1x2x240xf32>
    %47 = vector.shape_cast %46 : vector<1x2x240xf32> to vector<2x240xf32>
    %48 = arith.mulf %33, %47 : vector<2x240xf32>
    %49 = arith.addf %27, %48 : vector<2x240xf32>
    %c21 = arith.constant 21 : index
    %c0_25 = arith.constant 0 : index
    %c0_26 = arith.constant 0 : index
    %50 = vector.load %arg5[%c21, %c0_25, %c0_26] : memref<25x2x256xf32, #tpu.memory_space<vmem>>, vector<1x2x240xf32>
    %51 = vector.shape_cast %50 : vector<1x2x240xf32> to vector<2x240xf32>
    %52 = arith.mulf %33, %51 : vector<2x240xf32>
    %53 = arith.addf %31, %52 : vector<2x240xf32>
    %c2 = arith.constant 2 : index
    %54 = memref.load %arg1[%c2] : memref<30xf32, #tpu.memory_space<smem>>
    %55 = vector.broadcast %54 : f32 to vector<2x240xf32>
    %c2_27 = arith.constant 2 : index
    %c0_28 = arith.constant 0 : index
    %c0_29 = arith.constant 0 : index
    %56 = vector.load %arg5[%c2_27, %c0_28, %c0_29] : memref<25x2x256xf32, #tpu.memory_space<vmem>>, vector<1x2x240xf32>
    %57 = vector.shape_cast %56 : vector<1x2x240xf32> to vector<2x240xf32>
    %58 = arith.mulf %55, %57 : vector<2x240xf32>
    %59 = arith.addf %37, %58 : vector<2x240xf32>
    %c7 = arith.constant 7 : index
    %c0_30 = arith.constant 0 : index
    %c0_31 = arith.constant 0 : index
    %60 = vector.load %arg5[%c7, %c0_30, %c0_31] : memref<25x2x256xf32, #tpu.memory_space<vmem>>, vector<1x2x240xf32>
    %61 = vector.shape_cast %60 : vector<1x2x240xf32> to vector<2x240xf32>
    %62 = arith.mulf %55, %61 : vector<2x240xf32>
    %63 = arith.addf %41, %62 : vector<2x240xf32>
    %c12 = arith.constant 12 : index
    %c0_32 = arith.constant 0 : index
    %c0_33 = arith.constant 0 : index
    %64 = vector.load %arg5[%c12, %c0_32, %c0_33] : memref<25x2x256xf32, #tpu.memory_space<vmem>>, vector<1x2x240xf32>
    %65 = vector.shape_cast %64 : vector<1x2x240xf32> to vector<2x240xf32>
    %66 = arith.mulf %55, %65 : vector<2x240xf32>
    %67 = arith.addf %45, %66 : vector<2x240xf32>
    %c17 = arith.constant 17 : index
    %c0_34 = arith.constant 0 : index
    %c0_35 = arith.constant 0 : index
    %68 = vector.load %arg5[%c17, %c0_34, %c0_35] : memref<25x2x256xf32, #tpu.memory_space<vmem>>, vector<1x2x240xf32>
    %69 = vector.shape_cast %68 : vector<1x2x240xf32> to vector<2x240xf32>
    %70 = arith.mulf %55, %69 : vector<2x240xf32>
    %71 = arith.addf %49, %70 : vector<2x240xf32>
    %c22 = arith.constant 22 : index
    %c0_36 = arith.constant 0 : index
    %c0_37 = arith.constant 0 : index
    %72 = vector.load %arg5[%c22, %c0_36, %c0_37] : memref<25x2x256xf32, #tpu.memory_space<vmem>>, vector<1x2x240xf32>
    %73 = vector.shape_cast %72 : vector<1x2x240xf32> to vector<2x240xf32>
    %74 = arith.mulf %55, %73 : vector<2x240xf32>
    %75 = arith.addf %53, %74 : vector<2x240xf32>
    %c3 = arith.constant 3 : index
    %76 = memref.load %arg1[%c3] : memref<30xf32, #tpu.memory_space<smem>>
    %77 = vector.broadcast %76 : f32 to vector<2x240xf32>
    %c3_38 = arith.constant 3 : index
    %c0_39 = arith.constant 0 : index
    %c0_40 = arith.constant 0 : index
    %78 = vector.load %arg5[%c3_38, %c0_39, %c0_40] : memref<25x2x256xf32, #tpu.memory_space<vmem>>, vector<1x2x240xf32>
    %79 = vector.shape_cast %78 : vector<1x2x240xf32> to vector<2x240xf32>
    %80 = arith.mulf %77, %79 : vector<2x240xf32>
    %81 = arith.addf %59, %80 : vector<2x240xf32>
    %c8 = arith.constant 8 : index
    %c0_41 = arith.constant 0 : index
    %c0_42 = arith.constant 0 : index
    %82 = vector.load %arg5[%c8, %c0_41, %c0_42] : memref<25x2x256xf32, #tpu.memory_space<vmem>>, vector<1x2x240xf32>
    %83 = vector.shape_cast %82 : vector<1x2x240xf32> to vector<2x240xf32>
    %84 = arith.mulf %77, %83 : vector<2x240xf32>
    %85 = arith.addf %63, %84 : vector<2x240xf32>
    %c13 = arith.constant 13 : index
    %c0_43 = arith.constant 0 : index
    %c0_44 = arith.constant 0 : index
    %86 = vector.load %arg5[%c13, %c0_43, %c0_44] : memref<25x2x256xf32, #tpu.memory_space<vmem>>, vector<1x2x240xf32>
    %87 = vector.shape_cast %86 : vector<1x2x240xf32> to vector<2x240xf32>
    %88 = arith.mulf %77, %87 : vector<2x240xf32>
    %89 = arith.addf %67, %88 : vector<2x240xf32>
    %c18 = arith.constant 18 : index
    %c0_45 = arith.constant 0 : index
    %c0_46 = arith.constant 0 : index
    %90 = vector.load %arg5[%c18, %c0_45, %c0_46] : memref<25x2x256xf32, #tpu.memory_space<vmem>>, vector<1x2x240xf32>
    %91 = vector.shape_cast %90 : vector<1x2x240xf32> to vector<2x240xf32>
    %92 = arith.mulf %77, %91 : vector<2x240xf32>
    %93 = arith.addf %71, %92 : vector<2x240xf32>
    %c23 = arith.constant 23 : index
    %c0_47 = arith.constant 0 : index
    %c0_48 = arith.constant 0 : index
    %94 = vector.load %arg5[%c23, %c0_47, %c0_48] : memref<25x2x256xf32, #tpu.memory_space<vmem>>, vector<1x2x240xf32>
    %95 = vector.shape_cast %94 : vector<1x2x240xf32> to vector<2x240xf32>
    %96 = arith.mulf %77, %95 : vector<2x240xf32>
    %97 = arith.addf %75, %96 : vector<2x240xf32>
    %c4 = arith.constant 4 : index
    %98 = memref.load %arg1[%c4] : memref<30xf32, #tpu.memory_space<smem>>
    %99 = vector.broadcast %98 : f32 to vector<2x240xf32>
    %c4_49 = arith.constant 4 : index
    %c0_50 = arith.constant 0 : index
    %c0_51 = arith.constant 0 : index
    %100 = vector.load %arg5[%c4_49, %c0_50, %c0_51] : memref<25x2x256xf32, #tpu.memory_space<vmem>>, vector<1x2x240xf32>
    %101 = vector.shape_cast %100 : vector<1x2x240xf32> to vector<2x240xf32>
    %102 = arith.mulf %99, %101 : vector<2x240xf32>
    %103 = arith.addf %81, %102 : vector<2x240xf32>
    %c9 = arith.constant 9 : index
    %c0_52 = arith.constant 0 : index
    %c0_53 = arith.constant 0 : index
    %104 = vector.load %arg5[%c9, %c0_52, %c0_53] : memref<25x2x256xf32, #tpu.memory_space<vmem>>, vector<1x2x240xf32>
    %105 = vector.shape_cast %104 : vector<1x2x240xf32> to vector<2x240xf32>
    %106 = arith.mulf %99, %105 : vector<2x240xf32>
    %107 = arith.addf %85, %106 : vector<2x240xf32>
    %c14 = arith.constant 14 : index
    %c0_54 = arith.constant 0 : index
    %c0_55 = arith.constant 0 : index
    %108 = vector.load %arg5[%c14, %c0_54, %c0_55] : memref<25x2x256xf32, #tpu.memory_space<vmem>>, vector<1x2x240xf32>
    %109 = vector.shape_cast %108 : vector<1x2x240xf32> to vector<2x240xf32>
    %110 = arith.mulf %99, %109 : vector<2x240xf32>
    %111 = arith.addf %89, %110 : vector<2x240xf32>
    %c19 = arith.constant 19 : index
    %c0_56 = arith.constant 0 : index
    %c0_57 = arith.constant 0 : index
    %112 = vector.load %arg5[%c19, %c0_56, %c0_57] : memref<25x2x256xf32, #tpu.memory_space<vmem>>, vector<1x2x240xf32>
    %113 = vector.shape_cast %112 : vector<1x2x240xf32> to vector<2x240xf32>
    %114 = arith.mulf %99, %113 : vector<2x240xf32>
    %115 = arith.addf %93, %114 : vector<2x240xf32>
    %c24 = arith.constant 24 : index
    %c0_58 = arith.constant 0 : index
    %c0_59 = arith.constant 0 : index
    %116 = vector.load %arg5[%c24, %c0_58, %c0_59] : memref<25x2x256xf32, #tpu.memory_space<vmem>>, vector<1x2x240xf32>
    %117 = vector.shape_cast %116 : vector<1x2x240xf32> to vector<2x240xf32>
    %118 = arith.mulf %99, %117 : vector<2x240xf32>
    %119 = arith.addf %97, %118 : vector<2x240xf32>
    %c5_60 = arith.constant 5 : index
    %120 = memref.load %arg1[%c5_60] : memref<30xf32, #tpu.memory_space<smem>>
    %121 = vector.broadcast %120 : f32 to vector<2x240xf32>
    %c5_61 = arith.constant 5 : index
    %c0_62 = arith.constant 0 : index
    %c0_63 = arith.constant 0 : index
    %122 = vector.load %arg5[%c5_61, %c0_62, %c0_63] : memref<25x2x256xf32, #tpu.memory_space<vmem>>, vector<1x2x240xf32>
    %123 = vector.shape_cast %122 : vector<1x2x240xf32> to vector<2x240xf32>
    %124 = arith.mulf %121, %123 : vector<2x240xf32>
    %125 = arith.addf %103, %124 : vector<2x240xf32>
    %c10_64 = arith.constant 10 : index
    %c0_65 = arith.constant 0 : index
    %c0_66 = arith.constant 0 : index
    %126 = vector.load %arg5[%c10_64, %c0_65, %c0_66] : memref<25x2x256xf32, #tpu.memory_space<vmem>>, vector<1x2x240xf32>
    %127 = vector.shape_cast %126 : vector<1x2x240xf32> to vector<2x240xf32>
    %128 = arith.mulf %121, %127 : vector<2x240xf32>
    %129 = arith.addf %107, %128 : vector<2x240xf32>
    %c15_67 = arith.constant 15 : index
    %c0_68 = arith.constant 0 : index
    %c0_69 = arith.constant 0 : index
    %130 = vector.load %arg5[%c15_67, %c0_68, %c0_69] : memref<25x2x256xf32, #tpu.memory_space<vmem>>, vector<1x2x240xf32>
    %131 = vector.shape_cast %130 : vector<1x2x240xf32> to vector<2x240xf32>
    %132 = arith.mulf %121, %131 : vector<2x240xf32>
    %133 = arith.addf %111, %132 : vector<2x240xf32>
    %c20_70 = arith.constant 20 : index
    %c0_71 = arith.constant 0 : index
    %c0_72 = arith.constant 0 : index
    %134 = vector.load %arg5[%c20_70, %c0_71, %c0_72] : memref<25x2x256xf32, #tpu.memory_space<vmem>>, vector<1x2x240xf32>
    %135 = vector.shape_cast %134 : vector<1x2x240xf32> to vector<2x240xf32>
    %136 = arith.mulf %121, %135 : vector<2x240xf32>
    %137 = arith.addf %115, %136 : vector<2x240xf32>
    %c0_73 = arith.constant 0 : index
    %c0_74 = arith.constant 0 : index
    %c1_75 = arith.constant 1 : index
    %138 = vector.load %arg5[%c0_73, %c0_74, %c1_75] : memref<25x2x256xf32, #tpu.memory_space<vmem>>, vector<1x2x240xf32>
    %139 = vector.shape_cast %138 : vector<1x2x240xf32> to vector<2x240xf32>
    %140 = arith.mulf %121, %139 : vector<2x240xf32>
    %141 = arith.addf %119, %140 : vector<2x240xf32>
    %c6_76 = arith.constant 6 : index
    %142 = memref.load %arg1[%c6_76] : memref<30xf32, #tpu.memory_space<smem>>
    %143 = vector.broadcast %142 : f32 to vector<2x240xf32>
    %c6_77 = arith.constant 6 : index
    %c0_78 = arith.constant 0 : index
    %c0_79 = arith.constant 0 : index
    %144 = vector.load %arg5[%c6_77, %c0_78, %c0_79] : memref<25x2x256xf32, #tpu.memory_space<vmem>>, vector<1x2x240xf32>
    %145 = vector.shape_cast %144 : vector<1x2x240xf32> to vector<2x240xf32>
    %146 = arith.mulf %143, %145 : vector<2x240xf32>
    %147 = arith.addf %125, %146 : vector<2x240xf32>
    %c11_80 = arith.constant 11 : index
    %c0_81 = arith.constant 0 : index
    %c0_82 = arith.constant 0 : index
    %148 = vector.load %arg5[%c11_80, %c0_81, %c0_82] : memref<25x2x256xf32, #tpu.memory_space<vmem>>, vector<1x2x240xf32>
    %149 = vector.shape_cast %148 : vector<1x2x240xf32> to vector<2x240xf32>
    %150 = arith.mulf %143, %149 : vector<2x240xf32>
    %151 = arith.addf %129, %150 : vector<2x240xf32>
    %c16_83 = arith.constant 16 : index
    %c0_84 = arith.constant 0 : index
    %c0_85 = arith.constant 0 : index
    %152 = vector.load %arg5[%c16_83, %c0_84, %c0_85] : memref<25x2x256xf32, #tpu.memory_space<vmem>>, vector<1x2x240xf32>
    %153 = vector.shape_cast %152 : vector<1x2x240xf32> to vector<2x240xf32>
    %154 = arith.mulf %143, %153 : vector<2x240xf32>
    %155 = arith.addf %133, %154 : vector<2x240xf32>
    %c21_86 = arith.constant 21 : index
    %c0_87 = arith.constant 0 : index
    %c0_88 = arith.constant 0 : index
    %156 = vector.load %arg5[%c21_86, %c0_87, %c0_88] : memref<25x2x256xf32, #tpu.memory_space<vmem>>, vector<1x2x240xf32>
    %157 = vector.shape_cast %156 : vector<1x2x240xf32> to vector<2x240xf32>
    %158 = arith.mulf %143, %157 : vector<2x240xf32>
    %159 = arith.addf %137, %158 : vector<2x240xf32>
    %c1_89 = arith.constant 1 : index
    %c0_90 = arith.constant 0 : index
    %c1_91 = arith.constant 1 : index
    %160 = vector.load %arg5[%c1_89, %c0_90, %c1_91] : memref<25x2x256xf32, #tpu.memory_space<vmem>>, vector<1x2x240xf32>
    %161 = vector.shape_cast %160 : vector<1x2x240xf32> to vector<2x240xf32>
    %162 = arith.mulf %143, %161 : vector<2x240xf32>
    %163 = arith.addf %141, %162 : vector<2x240xf32>
    %c7_92 = arith.constant 7 : index
    %164 = memref.load %arg1[%c7_92] : memref<30xf32, #tpu.memory_space<smem>>
    %165 = vector.broadcast %164 : f32 to vector<2x240xf32>
    %c7_93 = arith.constant 7 : index
    %c0_94 = arith.constant 0 : index
    %c0_95 = arith.constant 0 : index
    %166 = vector.load %arg5[%c7_93, %c0_94, %c0_95] : memref<25x2x256xf32, #tpu.memory_space<vmem>>, vector<1x2x240xf32>
    %167 = vector.shape_cast %166 : vector<1x2x240xf32> to vector<2x240xf32>
    %168 = arith.mulf %165, %167 : vector<2x240xf32>
    %169 = arith.addf %147, %168 : vector<2x240xf32>
    %c12_96 = arith.constant 12 : index
    %c0_97 = arith.constant 0 : index
    %c0_98 = arith.constant 0 : index
    %170 = vector.load %arg5[%c12_96, %c0_97, %c0_98] : memref<25x2x256xf32, #tpu.memory_space<vmem>>, vector<1x2x240xf32>
    %171 = vector.shape_cast %170 : vector<1x2x240xf32> to vector<2x240xf32>
    %172 = arith.mulf %165, %171 : vector<2x240xf32>
    %173 = arith.addf %151, %172 : vector<2x240xf32>
    %c17_99 = arith.constant 17 : index
    %c0_100 = arith.constant 0 : index
    %c0_101 = arith.constant 0 : index
    %174 = vector.load %arg5[%c17_99, %c0_100, %c0_101] : memref<25x2x256xf32, #tpu.memory_space<vmem>>, vector<1x2x240xf32>
    %175 = vector.shape_cast %174 : vector<1x2x240xf32> to vector<2x240xf32>
    %176 = arith.mulf %165, %175 : vector<2x240xf32>
    %177 = arith.addf %155, %176 : vector<2x240xf32>
    %c22_102 = arith.constant 22 : index
    %c0_103 = arith.constant 0 : index
    %c0_104 = arith.constant 0 : index
    %178 = vector.load %arg5[%c22_102, %c0_103, %c0_104] : memref<25x2x256xf32, #tpu.memory_space<vmem>>, vector<1x2x240xf32>
    %179 = vector.shape_cast %178 : vector<1x2x240xf32> to vector<2x240xf32>
    %180 = arith.mulf %165, %179 : vector<2x240xf32>
    %181 = arith.addf %159, %180 : vector<2x240xf32>
    %c2_105 = arith.constant 2 : index
    %c0_106 = arith.constant 0 : index
    %c1_107 = arith.constant 1 : index
    %182 = vector.load %arg5[%c2_105, %c0_106, %c1_107] : memref<25x2x256xf32, #tpu.memory_space<vmem>>, vector<1x2x240xf32>
    %183 = vector.shape_cast %182 : vector<1x2x240xf32> to vector<2x240xf32>
    %184 = arith.mulf %165, %183 : vector<2x240xf32>
    %185 = arith.addf %163, %184 : vector<2x240xf32>
    %c8_108 = arith.constant 8 : index
    %186 = memref.load %arg1[%c8_108] : memref<30xf32, #tpu.memory_space<smem>>
    %187 = vector.broadcast %186 : f32 to vector<2x240xf32>
    %c8_109 = arith.constant 8 : index
    %c0_110 = arith.constant 0 : index
    %c0_111 = arith.constant 0 : index
    %188 = vector.load %arg5[%c8_109, %c0_110, %c0_111] : memref<25x2x256xf32, #tpu.memory_space<vmem>>, vector<1x2x240xf32>
    %189 = vector.shape_cast %188 : vector<1x2x240xf32> to vector<2x240xf32>
    %190 = arith.mulf %187, %189 : vector<2x240xf32>
    %191 = arith.addf %169, %190 : vector<2x240xf32>
    %c13_112 = arith.constant 13 : index
    %c0_113 = arith.constant 0 : index
    %c0_114 = arith.constant 0 : index
    %192 = vector.load %arg5[%c13_112, %c0_113, %c0_114] : memref<25x2x256xf32, #tpu.memory_space<vmem>>, vector<1x2x240xf32>
    %193 = vector.shape_cast %192 : vector<1x2x240xf32> to vector<2x240xf32>
    %194 = arith.mulf %187, %193 : vector<2x240xf32>
    %195 = arith.addf %173, %194 : vector<2x240xf32>
    %c18_115 = arith.constant 18 : index
    %c0_116 = arith.constant 0 : index
    %c0_117 = arith.constant 0 : index
    %196 = vector.load %arg5[%c18_115, %c0_116, %c0_117] : memref<25x2x256xf32, #tpu.memory_space<vmem>>, vector<1x2x240xf32>
    %197 = vector.shape_cast %196 : vector<1x2x240xf32> to vector<2x240xf32>
    %198 = arith.mulf %187, %197 : vector<2x240xf32>
    %199 = arith.addf %177, %198 : vector<2x240xf32>
    %c23_118 = arith.constant 23 : index
    %c0_119 = arith.constant 0 : index
    %c0_120 = arith.constant 0 : index
    %200 = vector.load %arg5[%c23_118, %c0_119, %c0_120] : memref<25x2x256xf32, #tpu.memory_space<vmem>>, vector<1x2x240xf32>
    %201 = vector.shape_cast %200 : vector<1x2x240xf32> to vector<2x240xf32>
    %202 = arith.mulf %187, %201 : vector<2x240xf32>
    %203 = arith.addf %181, %202 : vector<2x240xf32>
    %c3_121 = arith.constant 3 : index
    %c0_122 = arith.constant 0 : index
    %c1_123 = arith.constant 1 : index
    %204 = vector.load %arg5[%c3_121, %c0_122, %c1_123] : memref<25x2x256xf32, #tpu.memory_space<vmem>>, vector<1x2x240xf32>
    %205 = vector.shape_cast %204 : vector<1x2x240xf32> to vector<2x240xf32>
    %206 = arith.mulf %187, %205 : vector<2x240xf32>
    %207 = arith.addf %185, %206 : vector<2x240xf32>
    %c9_124 = arith.constant 9 : index
    %208 = memref.load %arg1[%c9_124] : memref<30xf32, #tpu.memory_space<smem>>
    %209 = vector.broadcast %208 : f32 to vector<2x240xf32>
    %c9_125 = arith.constant 9 : index
    %c0_126 = arith.constant 0 : index
    %c0_127 = arith.constant 0 : index
    %210 = vector.load %arg5[%c9_125, %c0_126, %c0_127] : memref<25x2x256xf32, #tpu.memory_space<vmem>>, vector<1x2x240xf32>
    %211 = vector.shape_cast %210 : vector<1x2x240xf32> to vector<2x240xf32>
    %212 = arith.mulf %209, %211 : vector<2x240xf32>
    %213 = arith.addf %191, %212 : vector<2x240xf32>
    %c14_128 = arith.constant 14 : index
    %c0_129 = arith.constant 0 : index
    %c0_130 = arith.constant 0 : index
    %214 = vector.load %arg5[%c14_128, %c0_129, %c0_130] : memref<25x2x256xf32, #tpu.memory_space<vmem>>, vector<1x2x240xf32>
    %215 = vector.shape_cast %214 : vector<1x2x240xf32> to vector<2x240xf32>
    %216 = arith.mulf %209, %215 : vector<2x240xf32>
    %217 = arith.addf %195, %216 : vector<2x240xf32>
    %c19_131 = arith.constant 19 : index
    %c0_132 = arith.constant 0 : index
    %c0_133 = arith.constant 0 : index
    %218 = vector.load %arg5[%c19_131, %c0_132, %c0_133] : memref<25x2x256xf32, #tpu.memory_space<vmem>>, vector<1x2x240xf32>
    %219 = vector.shape_cast %218 : vector<1x2x240xf32> to vector<2x240xf32>
    %220 = arith.mulf %209, %219 : vector<2x240xf32>
    %221 = arith.addf %199, %220 : vector<2x240xf32>
    %c24_134 = arith.constant 24 : index
    %c0_135 = arith.constant 0 : index
    %c0_136 = arith.constant 0 : index
    %222 = vector.load %arg5[%c24_134, %c0_135, %c0_136] : memref<25x2x256xf32, #tpu.memory_space<vmem>>, vector<1x2x240xf32>
    %223 = vector.shape_cast %222 : vector<1x2x240xf32> to vector<2x240xf32>
    %224 = arith.mulf %209, %223 : vector<2x240xf32>
    %225 = arith.addf %203, %224 : vector<2x240xf32>
    %c4_137 = arith.constant 4 : index
    %c0_138 = arith.constant 0 : index
    %c1_139 = arith.constant 1 : index
    %226 = vector.load %arg5[%c4_137, %c0_138, %c1_139] : memref<25x2x256xf32, #tpu.memory_space<vmem>>, vector<1x2x240xf32>
    %227 = vector.shape_cast %226 : vector<1x2x240xf32> to vector<2x240xf32>
    %228 = arith.mulf %209, %227 : vector<2x240xf32>
    %229 = arith.addf %207, %228 : vector<2x240xf32>
    %c10_140 = arith.constant 10 : index
    %230 = memref.load %arg1[%c10_140] : memref<30xf32, #tpu.memory_space<smem>>
    %231 = vector.broadcast %230 : f32 to vector<2x240xf32>
    %c10_141 = arith.constant 10 : index
    %c0_142 = arith.constant 0 : index
    %c0_143 = arith.constant 0 : index
    %232 = vector.load %arg5[%c10_141, %c0_142, %c0_143] : memref<25x2x256xf32, #tpu.memory_space<vmem>>, vector<1x2x240xf32>
    %233 = vector.shape_cast %232 : vector<1x2x240xf32> to vector<2x240xf32>
    %234 = arith.mulf %231, %233 : vector<2x240xf32>
    %235 = arith.addf %213, %234 : vector<2x240xf32>
    %c15_144 = arith.constant 15 : index
    %c0_145 = arith.constant 0 : index
    %c0_146 = arith.constant 0 : index
    %236 = vector.load %arg5[%c15_144, %c0_145, %c0_146] : memref<25x2x256xf32, #tpu.memory_space<vmem>>, vector<1x2x240xf32>
    %237 = vector.shape_cast %236 : vector<1x2x240xf32> to vector<2x240xf32>
    %238 = arith.mulf %231, %237 : vector<2x240xf32>
    %239 = arith.addf %217, %238 : vector<2x240xf32>
    %c20_147 = arith.constant 20 : index
    %c0_148 = arith.constant 0 : index
    %c0_149 = arith.constant 0 : index
    %240 = vector.load %arg5[%c20_147, %c0_148, %c0_149] : memref<25x2x256xf32, #tpu.memory_space<vmem>>, vector<1x2x240xf32>
    %241 = vector.shape_cast %240 : vector<1x2x240xf32> to vector<2x240xf32>
    %242 = arith.mulf %231, %241 : vector<2x240xf32>
    %243 = arith.addf %221, %242 : vector<2x240xf32>
    %c0_150 = arith.constant 0 : index
    %c0_151 = arith.constant 0 : index
    %c1_152 = arith.constant 1 : index
    %244 = vector.load %arg5[%c0_150, %c0_151, %c1_152] : memref<25x2x256xf32, #tpu.memory_space<vmem>>, vector<1x2x240xf32>
    %245 = vector.shape_cast %244 : vector<1x2x240xf32> to vector<2x240xf32>
    %246 = arith.mulf %231, %245 : vector<2x240xf32>
    %247 = arith.addf %225, %246 : vector<2x240xf32>
    %c5_153 = arith.constant 5 : index
    %c0_154 = arith.constant 0 : index
    %c1_155 = arith.constant 1 : index
    %248 = vector.load %arg5[%c5_153, %c0_154, %c1_155] : memref<25x2x256xf32, #tpu.memory_space<vmem>>, vector<1x2x240xf32>
    %249 = vector.shape_cast %248 : vector<1x2x240xf32> to vector<2x240xf32>
    %250 = arith.mulf %231, %249 : vector<2x240xf32>
    %251 = arith.addf %229, %250 : vector<2x240xf32>
    %c11_156 = arith.constant 11 : index
    %252 = memref.load %arg1[%c11_156] : memref<30xf32, #tpu.memory_space<smem>>
    %253 = vector.broadcast %252 : f32 to vector<2x240xf32>
    %c11_157 = arith.constant 11 : index
    %c0_158 = arith.constant 0 : index
    %c0_159 = arith.constant 0 : index
    %254 = vector.load %arg5[%c11_157, %c0_158, %c0_159] : memref<25x2x256xf32, #tpu.memory_space<vmem>>, vector<1x2x240xf32>
    %255 = vector.shape_cast %254 : vector<1x2x240xf32> to vector<2x240xf32>
    %256 = arith.mulf %253, %255 : vector<2x240xf32>
    %257 = arith.addf %235, %256 : vector<2x240xf32>
    %c16_160 = arith.constant 16 : index
    %c0_161 = arith.constant 0 : index
    %c0_162 = arith.constant 0 : index
    %258 = vector.load %arg5[%c16_160, %c0_161, %c0_162] : memref<25x2x256xf32, #tpu.memory_space<vmem>>, vector<1x2x240xf32>
    %259 = vector.shape_cast %258 : vector<1x2x240xf32> to vector<2x240xf32>
    %260 = arith.mulf %253, %259 : vector<2x240xf32>
    %261 = arith.addf %239, %260 : vector<2x240xf32>
    %c21_163 = arith.constant 21 : index
    %c0_164 = arith.constant 0 : index
    %c0_165 = arith.constant 0 : index
    %262 = vector.load %arg5[%c21_163, %c0_164, %c0_165] : memref<25x2x256xf32, #tpu.memory_space<vmem>>, vector<1x2x240xf32>
    %263 = vector.shape_cast %262 : vector<1x2x240xf32> to vector<2x240xf32>
    %264 = arith.mulf %253, %263 : vector<2x240xf32>
    %265 = arith.addf %243, %264 : vector<2x240xf32>
    %c1_166 = arith.constant 1 : index
    %c0_167 = arith.constant 0 : index
    %c1_168 = arith.constant 1 : index
    %266 = vector.load %arg5[%c1_166, %c0_167, %c1_168] : memref<25x2x256xf32, #tpu.memory_space<vmem>>, vector<1x2x240xf32>
    %267 = vector.shape_cast %266 : vector<1x2x240xf32> to vector<2x240xf32>
    %268 = arith.mulf %253, %267 : vector<2x240xf32>
    %269 = arith.addf %247, %268 : vector<2x240xf32>
    %c6_169 = arith.constant 6 : index
    %c0_170 = arith.constant 0 : index
    %c1_171 = arith.constant 1 : index
    %270 = vector.load %arg5[%c6_169, %c0_170, %c1_171] : memref<25x2x256xf32, #tpu.memory_space<vmem>>, vector<1x2x240xf32>
    %271 = vector.shape_cast %270 : vector<1x2x240xf32> to vector<2x240xf32>
    %272 = arith.mulf %253, %271 : vector<2x240xf32>
    %273 = arith.addf %251, %272 : vector<2x240xf32>
    %c12_172 = arith.constant 12 : index
    %274 = memref.load %arg1[%c12_172] : memref<30xf32, #tpu.memory_space<smem>>
    %275 = vector.broadcast %274 : f32 to vector<2x240xf32>
    %c12_173 = arith.constant 12 : index
    %c0_174 = arith.constant 0 : index
    %c0_175 = arith.constant 0 : index
    %276 = vector.load %arg5[%c12_173, %c0_174, %c0_175] : memref<25x2x256xf32, #tpu.memory_space<vmem>>, vector<1x2x240xf32>
    %277 = vector.shape_cast %276 : vector<1x2x240xf32> to vector<2x240xf32>
    %278 = arith.mulf %275, %277 : vector<2x240xf32>
    %279 = arith.addf %257, %278 : vector<2x240xf32>
    %c17_176 = arith.constant 17 : index
    %c0_177 = arith.constant 0 : index
    %c0_178 = arith.constant 0 : index
    %280 = vector.load %arg5[%c17_176, %c0_177, %c0_178] : memref<25x2x256xf32, #tpu.memory_space<vmem>>, vector<1x2x240xf32>
    %281 = vector.shape_cast %280 : vector<1x2x240xf32> to vector<2x240xf32>
    %282 = arith.mulf %275, %281 : vector<2x240xf32>
    %283 = arith.addf %261, %282 : vector<2x240xf32>
    %c22_179 = arith.constant 22 : index
    %c0_180 = arith.constant 0 : index
    %c0_181 = arith.constant 0 : index
    %284 = vector.load %arg5[%c22_179, %c0_180, %c0_181] : memref<25x2x256xf32, #tpu.memory_space<vmem>>, vector<1x2x240xf32>
    %285 = vector.shape_cast %284 : vector<1x2x240xf32> to vector<2x240xf32>
    %286 = arith.mulf %275, %285 : vector<2x240xf32>
    %287 = arith.addf %265, %286 : vector<2x240xf32>
    %c2_182 = arith.constant 2 : index
    %c0_183 = arith.constant 0 : index
    %c1_184 = arith.constant 1 : index
    %288 = vector.load %arg5[%c2_182, %c0_183, %c1_184] : memref<25x2x256xf32, #tpu.memory_space<vmem>>, vector<1x2x240xf32>
    %289 = vector.shape_cast %288 : vector<1x2x240xf32> to vector<2x240xf32>
    %290 = arith.mulf %275, %289 : vector<2x240xf32>
    %291 = arith.addf %269, %290 : vector<2x240xf32>
    %c7_185 = arith.constant 7 : index
    %c0_186 = arith.constant 0 : index
    %c1_187 = arith.constant 1 : index
    %292 = vector.load %arg5[%c7_185, %c0_186, %c1_187] : memref<25x2x256xf32, #tpu.memory_space<vmem>>, vector<1x2x240xf32>
    %293 = vector.shape_cast %292 : vector<1x2x240xf32> to vector<2x240xf32>
    %294 = arith.mulf %275, %293 : vector<2x240xf32>
    %295 = arith.addf %273, %294 : vector<2x240xf32>
    %c13_188 = arith.constant 13 : index
    %296 = memref.load %arg1[%c13_188] : memref<30xf32, #tpu.memory_space<smem>>
    %297 = vector.broadcast %296 : f32 to vector<2x240xf32>
    %c13_189 = arith.constant 13 : index
    %c0_190 = arith.constant 0 : index
    %c0_191 = arith.constant 0 : index
    %298 = vector.load %arg5[%c13_189, %c0_190, %c0_191] : memref<25x2x256xf32, #tpu.memory_space<vmem>>, vector<1x2x240xf32>
    %299 = vector.shape_cast %298 : vector<1x2x240xf32> to vector<2x240xf32>
    %300 = arith.mulf %297, %299 : vector<2x240xf32>
    %301 = arith.addf %279, %300 : vector<2x240xf32>
    %c18_192 = arith.constant 18 : index
    %c0_193 = arith.constant 0 : index
    %c0_194 = arith.constant 0 : index
    %302 = vector.load %arg5[%c18_192, %c0_193, %c0_194] : memref<25x2x256xf32, #tpu.memory_space<vmem>>, vector<1x2x240xf32>
    %303 = vector.shape_cast %302 : vector<1x2x240xf32> to vector<2x240xf32>
    %304 = arith.mulf %297, %303 : vector<2x240xf32>
    %305 = arith.addf %283, %304 : vector<2x240xf32>
    %c23_195 = arith.constant 23 : index
    %c0_196 = arith.constant 0 : index
    %c0_197 = arith.constant 0 : index
    %306 = vector.load %arg5[%c23_195, %c0_196, %c0_197] : memref<25x2x256xf32, #tpu.memory_space<vmem>>, vector<1x2x240xf32>
    %307 = vector.shape_cast %306 : vector<1x2x240xf32> to vector<2x240xf32>
    %308 = arith.mulf %297, %307 : vector<2x240xf32>
    %309 = arith.addf %287, %308 : vector<2x240xf32>
    %c3_198 = arith.constant 3 : index
    %c0_199 = arith.constant 0 : index
    %c1_200 = arith.constant 1 : index
    %310 = vector.load %arg5[%c3_198, %c0_199, %c1_200] : memref<25x2x256xf32, #tpu.memory_space<vmem>>, vector<1x2x240xf32>
    %311 = vector.shape_cast %310 : vector<1x2x240xf32> to vector<2x240xf32>
    %312 = arith.mulf %297, %311 : vector<2x240xf32>
    %313 = arith.addf %291, %312 : vector<2x240xf32>
    %c8_201 = arith.constant 8 : index
    %c0_202 = arith.constant 0 : index
    %c1_203 = arith.constant 1 : index
    %314 = vector.load %arg5[%c8_201, %c0_202, %c1_203] : memref<25x2x256xf32, #tpu.memory_space<vmem>>, vector<1x2x240xf32>
    %315 = vector.shape_cast %314 : vector<1x2x240xf32> to vector<2x240xf32>
    %316 = arith.mulf %297, %315 : vector<2x240xf32>
    %317 = arith.addf %295, %316 : vector<2x240xf32>
    %c14_204 = arith.constant 14 : index
    %318 = memref.load %arg1[%c14_204] : memref<30xf32, #tpu.memory_space<smem>>
    %319 = vector.broadcast %318 : f32 to vector<2x240xf32>
    %c14_205 = arith.constant 14 : index
    %c0_206 = arith.constant 0 : index
    %c0_207 = arith.constant 0 : index
    %320 = vector.load %arg5[%c14_205, %c0_206, %c0_207] : memref<25x2x256xf32, #tpu.memory_space<vmem>>, vector<1x2x240xf32>
    %321 = vector.shape_cast %320 : vector<1x2x240xf32> to vector<2x240xf32>
    %322 = arith.mulf %319, %321 : vector<2x240xf32>
    %323 = arith.addf %301, %322 : vector<2x240xf32>
    %c19_208 = arith.constant 19 : index
    %c0_209 = arith.constant 0 : index
    %c0_210 = arith.constant 0 : index
    %324 = vector.load %arg5[%c19_208, %c0_209, %c0_210] : memref<25x2x256xf32, #tpu.memory_space<vmem>>, vector<1x2x240xf32>
    %325 = vector.shape_cast %324 : vector<1x2x240xf32> to vector<2x240xf32>
    %326 = arith.mulf %319, %325 : vector<2x240xf32>
    %327 = arith.addf %305, %326 : vector<2x240xf32>
    %c24_211 = arith.constant 24 : index
    %c0_212 = arith.constant 0 : index
    %c0_213 = arith.constant 0 : index
    %328 = vector.load %arg5[%c24_211, %c0_212, %c0_213] : memref<25x2x256xf32, #tpu.memory_space<vmem>>, vector<1x2x240xf32>
    %329 = vector.shape_cast %328 : vector<1x2x240xf32> to vector<2x240xf32>
    %330 = arith.mulf %319, %329 : vector<2x240xf32>
    %331 = arith.addf %309, %330 : vector<2x240xf32>
    %c4_214 = arith.constant 4 : index
    %c0_215 = arith.constant 0 : index
    %c1_216 = arith.constant 1 : index
    %332 = vector.load %arg5[%c4_214, %c0_215, %c1_216] : memref<25x2x256xf32, #tpu.memory_space<vmem>>, vector<1x2x240xf32>
    %333 = vector.shape_cast %332 : vector<1x2x240xf32> to vector<2x240xf32>
    %334 = arith.mulf %319, %333 : vector<2x240xf32>
    %335 = arith.addf %313, %334 : vector<2x240xf32>
    %c9_217 = arith.constant 9 : index
    %c0_218 = arith.constant 0 : index
    %c1_219 = arith.constant 1 : index
    %336 = vector.load %arg5[%c9_217, %c0_218, %c1_219] : memref<25x2x256xf32, #tpu.memory_space<vmem>>, vector<1x2x240xf32>
    %337 = vector.shape_cast %336 : vector<1x2x240xf32> to vector<2x240xf32>
    %338 = arith.mulf %319, %337 : vector<2x240xf32>
    %339 = arith.addf %317, %338 : vector<2x240xf32>
    %c15_220 = arith.constant 15 : index
    %340 = memref.load %arg1[%c15_220] : memref<30xf32, #tpu.memory_space<smem>>
    %341 = vector.broadcast %340 : f32 to vector<2x240xf32>
    %c15_221 = arith.constant 15 : index
    %c0_222 = arith.constant 0 : index
    %c0_223 = arith.constant 0 : index
    %342 = vector.load %arg5[%c15_221, %c0_222, %c0_223] : memref<25x2x256xf32, #tpu.memory_space<vmem>>, vector<1x2x240xf32>
    %343 = vector.shape_cast %342 : vector<1x2x240xf32> to vector<2x240xf32>
    %344 = arith.mulf %341, %343 : vector<2x240xf32>
    %345 = arith.addf %323, %344 : vector<2x240xf32>
    %c20_224 = arith.constant 20 : index
    %c0_225 = arith.constant 0 : index
    %c0_226 = arith.constant 0 : index
    %346 = vector.load %arg5[%c20_224, %c0_225, %c0_226] : memref<25x2x256xf32, #tpu.memory_space<vmem>>, vector<1x2x240xf32>
    %347 = vector.shape_cast %346 : vector<1x2x240xf32> to vector<2x240xf32>
    %348 = arith.mulf %341, %347 : vector<2x240xf32>
    %349 = arith.addf %327, %348 : vector<2x240xf32>
    %c0_227 = arith.constant 0 : index
    %c0_228 = arith.constant 0 : index
    %c1_229 = arith.constant 1 : index
    %350 = vector.load %arg5[%c0_227, %c0_228, %c1_229] : memref<25x2x256xf32, #tpu.memory_space<vmem>>, vector<1x2x240xf32>
    %351 = vector.shape_cast %350 : vector<1x2x240xf32> to vector<2x240xf32>
    %352 = arith.mulf %341, %351 : vector<2x240xf32>
    %353 = arith.addf %331, %352 : vector<2x240xf32>
    %c5_230 = arith.constant 5 : index
    %c0_231 = arith.constant 0 : index
    %c1_232 = arith.constant 1 : index
    %354 = vector.load %arg5[%c5_230, %c0_231, %c1_232] : memref<25x2x256xf32, #tpu.memory_space<vmem>>, vector<1x2x240xf32>
    %355 = vector.shape_cast %354 : vector<1x2x240xf32> to vector<2x240xf32>
    %356 = arith.mulf %341, %355 : vector<2x240xf32>
    %357 = arith.addf %335, %356 : vector<2x240xf32>
    %c10_233 = arith.constant 10 : index
    %c0_234 = arith.constant 0 : index
    %c1_235 = arith.constant 1 : index
    %358 = vector.load %arg5[%c10_233, %c0_234, %c1_235] : memref<25x2x256xf32, #tpu.memory_space<vmem>>, vector<1x2x240xf32>
    %359 = vector.shape_cast %358 : vector<1x2x240xf32> to vector<2x240xf32>
    %360 = arith.mulf %341, %359 : vector<2x240xf32>
    %361 = arith.addf %339, %360 : vector<2x240xf32>
    %c16_236 = arith.constant 16 : index
    %362 = memref.load %arg1[%c16_236] : memref<30xf32, #tpu.memory_space<smem>>
    %363 = vector.broadcast %362 : f32 to vector<2x240xf32>
    %c16_237 = arith.constant 16 : index
    %c0_238 = arith.constant 0 : index
    %c0_239 = arith.constant 0 : index
    %364 = vector.load %arg5[%c16_237, %c0_238, %c0_239] : memref<25x2x256xf32, #tpu.memory_space<vmem>>, vector<1x2x240xf32>
    %365 = vector.shape_cast %364 : vector<1x2x240xf32> to vector<2x240xf32>
    %366 = arith.mulf %363, %365 : vector<2x240xf32>
    %367 = arith.addf %345, %366 : vector<2x240xf32>
    %c21_240 = arith.constant 21 : index
    %c0_241 = arith.constant 0 : index
    %c0_242 = arith.constant 0 : index
    %368 = vector.load %arg5[%c21_240, %c0_241, %c0_242] : memref<25x2x256xf32, #tpu.memory_space<vmem>>, vector<1x2x240xf32>
    %369 = vector.shape_cast %368 : vector<1x2x240xf32> to vector<2x240xf32>
    %370 = arith.mulf %363, %369 : vector<2x240xf32>
    %371 = arith.addf %349, %370 : vector<2x240xf32>
    %c1_243 = arith.constant 1 : index
    %c0_244 = arith.constant 0 : index
    %c1_245 = arith.constant 1 : index
    %372 = vector.load %arg5[%c1_243, %c0_244, %c1_245] : memref<25x2x256xf32, #tpu.memory_space<vmem>>, vector<1x2x240xf32>
    %373 = vector.shape_cast %372 : vector<1x2x240xf32> to vector<2x240xf32>
    %374 = arith.mulf %363, %373 : vector<2x240xf32>
    %375 = arith.addf %353, %374 : vector<2x240xf32>
    %c6_246 = arith.constant 6 : index
    %c0_247 = arith.constant 0 : index
    %c1_248 = arith.constant 1 : index
    %376 = vector.load %arg5[%c6_246, %c0_247, %c1_248] : memref<25x2x256xf32, #tpu.memory_space<vmem>>, vector<1x2x240xf32>
    %377 = vector.shape_cast %376 : vector<1x2x240xf32> to vector<2x240xf32>
    %378 = arith.mulf %363, %377 : vector<2x240xf32>
    %379 = arith.addf %357, %378 : vector<2x240xf32>
    %c11_249 = arith.constant 11 : index
    %c0_250 = arith.constant 0 : index
    %c1_251 = arith.constant 1 : index
    %380 = vector.load %arg5[%c11_249, %c0_250, %c1_251] : memref<25x2x256xf32, #tpu.memory_space<vmem>>, vector<1x2x240xf32>
    %381 = vector.shape_cast %380 : vector<1x2x240xf32> to vector<2x240xf32>
    %382 = arith.mulf %363, %381 : vector<2x240xf32>
    %383 = arith.addf %361, %382 : vector<2x240xf32>
    %c17_252 = arith.constant 17 : index
    %384 = memref.load %arg1[%c17_252] : memref<30xf32, #tpu.memory_space<smem>>
    %385 = vector.broadcast %384 : f32 to vector<2x240xf32>
    %c17_253 = arith.constant 17 : index
    %c0_254 = arith.constant 0 : index
    %c0_255 = arith.constant 0 : index
    %386 = vector.load %arg5[%c17_253, %c0_254, %c0_255] : memref<25x2x256xf32, #tpu.memory_space<vmem>>, vector<1x2x240xf32>
    %387 = vector.shape_cast %386 : vector<1x2x240xf32> to vector<2x240xf32>
    %388 = arith.mulf %385, %387 : vector<2x240xf32>
    %389 = arith.addf %367, %388 : vector<2x240xf32>
    %c22_256 = arith.constant 22 : index
    %c0_257 = arith.constant 0 : index
    %c0_258 = arith.constant 0 : index
    %390 = vector.load %arg5[%c22_256, %c0_257, %c0_258] : memref<25x2x256xf32, #tpu.memory_space<vmem>>, vector<1x2x240xf32>
    %391 = vector.shape_cast %390 : vector<1x2x240xf32> to vector<2x240xf32>
    %392 = arith.mulf %385, %391 : vector<2x240xf32>
    %393 = arith.addf %371, %392 : vector<2x240xf32>
    %c2_259 = arith.constant 2 : index
    %c0_260 = arith.constant 0 : index
    %c1_261 = arith.constant 1 : index
    %394 = vector.load %arg5[%c2_259, %c0_260, %c1_261] : memref<25x2x256xf32, #tpu.memory_space<vmem>>, vector<1x2x240xf32>
    %395 = vector.shape_cast %394 : vector<1x2x240xf32> to vector<2x240xf32>
    %396 = arith.mulf %385, %395 : vector<2x240xf32>
    %397 = arith.addf %375, %396 : vector<2x240xf32>
    %c7_262 = arith.constant 7 : index
    %c0_263 = arith.constant 0 : index
    %c1_264 = arith.constant 1 : index
    %398 = vector.load %arg5[%c7_262, %c0_263, %c1_264] : memref<25x2x256xf32, #tpu.memory_space<vmem>>, vector<1x2x240xf32>
    %399 = vector.shape_cast %398 : vector<1x2x240xf32> to vector<2x240xf32>
    %400 = arith.mulf %385, %399 : vector<2x240xf32>
    %401 = arith.addf %379, %400 : vector<2x240xf32>
    %c12_265 = arith.constant 12 : index
    %c0_266 = arith.constant 0 : index
    %c1_267 = arith.constant 1 : index
    %402 = vector.load %arg5[%c12_265, %c0_266, %c1_267] : memref<25x2x256xf32, #tpu.memory_space<vmem>>, vector<1x2x240xf32>
    %403 = vector.shape_cast %402 : vector<1x2x240xf32> to vector<2x240xf32>
    %404 = arith.mulf %385, %403 : vector<2x240xf32>
    %405 = arith.addf %383, %404 : vector<2x240xf32>
    %c18_268 = arith.constant 18 : index
    %406 = memref.load %arg1[%c18_268] : memref<30xf32, #tpu.memory_space<smem>>
    %407 = vector.broadcast %406 : f32 to vector<2x240xf32>
    %c18_269 = arith.constant 18 : index
    %c0_270 = arith.constant 0 : index
    %c0_271 = arith.constant 0 : index
    %408 = vector.load %arg5[%c18_269, %c0_270, %c0_271] : memref<25x2x256xf32, #tpu.memory_space<vmem>>, vector<1x2x240xf32>
    %409 = vector.shape_cast %408 : vector<1x2x240xf32> to vector<2x240xf32>
    %410 = arith.mulf %407, %409 : vector<2x240xf32>
    %411 = arith.addf %389, %410 : vector<2x240xf32>
    %c23_272 = arith.constant 23 : index
    %c0_273 = arith.constant 0 : index
    %c0_274 = arith.constant 0 : index
    %412 = vector.load %arg5[%c23_272, %c0_273, %c0_274] : memref<25x2x256xf32, #tpu.memory_space<vmem>>, vector<1x2x240xf32>
    %413 = vector.shape_cast %412 : vector<1x2x240xf32> to vector<2x240xf32>
    %414 = arith.mulf %407, %413 : vector<2x240xf32>
    %415 = arith.addf %393, %414 : vector<2x240xf32>
    %c3_275 = arith.constant 3 : index
    %c0_276 = arith.constant 0 : index
    %c1_277 = arith.constant 1 : index
    %416 = vector.load %arg5[%c3_275, %c0_276, %c1_277] : memref<25x2x256xf32, #tpu.memory_space<vmem>>, vector<1x2x240xf32>
    %417 = vector.shape_cast %416 : vector<1x2x240xf32> to vector<2x240xf32>
    %418 = arith.mulf %407, %417 : vector<2x240xf32>
    %419 = arith.addf %397, %418 : vector<2x240xf32>
    %c8_278 = arith.constant 8 : index
    %c0_279 = arith.constant 0 : index
    %c1_280 = arith.constant 1 : index
    %420 = vector.load %arg5[%c8_278, %c0_279, %c1_280] : memref<25x2x256xf32, #tpu.memory_space<vmem>>, vector<1x2x240xf32>
    %421 = vector.shape_cast %420 : vector<1x2x240xf32> to vector<2x240xf32>
    %422 = arith.mulf %407, %421 : vector<2x240xf32>
    %423 = arith.addf %401, %422 : vector<2x240xf32>
    %c13_281 = arith.constant 13 : index
    %c0_282 = arith.constant 0 : index
    %c1_283 = arith.constant 1 : index
    %424 = vector.load %arg5[%c13_281, %c0_282, %c1_283] : memref<25x2x256xf32, #tpu.memory_space<vmem>>, vector<1x2x240xf32>
    %425 = vector.shape_cast %424 : vector<1x2x240xf32> to vector<2x240xf32>
    %426 = arith.mulf %407, %425 : vector<2x240xf32>
    %427 = arith.addf %405, %426 : vector<2x240xf32>
    %c19_284 = arith.constant 19 : index
    %428 = memref.load %arg1[%c19_284] : memref<30xf32, #tpu.memory_space<smem>>
    %429 = vector.broadcast %428 : f32 to vector<2x240xf32>
    %c19_285 = arith.constant 19 : index
    %c0_286 = arith.constant 0 : index
    %c0_287 = arith.constant 0 : index
    %430 = vector.load %arg5[%c19_285, %c0_286, %c0_287] : memref<25x2x256xf32, #tpu.memory_space<vmem>>, vector<1x2x240xf32>
    %431 = vector.shape_cast %430 : vector<1x2x240xf32> to vector<2x240xf32>
    %432 = arith.mulf %429, %431 : vector<2x240xf32>
    %433 = arith.addf %411, %432 : vector<2x240xf32>
    %c24_288 = arith.constant 24 : index
    %c0_289 = arith.constant 0 : index
    %c0_290 = arith.constant 0 : index
    %434 = vector.load %arg5[%c24_288, %c0_289, %c0_290] : memref<25x2x256xf32, #tpu.memory_space<vmem>>, vector<1x2x240xf32>
    %435 = vector.shape_cast %434 : vector<1x2x240xf32> to vector<2x240xf32>
    %436 = arith.mulf %429, %435 : vector<2x240xf32>
    %437 = arith.addf %415, %436 : vector<2x240xf32>
    %c4_291 = arith.constant 4 : index
    %c0_292 = arith.constant 0 : index
    %c1_293 = arith.constant 1 : index
    %438 = vector.load %arg5[%c4_291, %c0_292, %c1_293] : memref<25x2x256xf32, #tpu.memory_space<vmem>>, vector<1x2x240xf32>
    %439 = vector.shape_cast %438 : vector<1x2x240xf32> to vector<2x240xf32>
    %440 = arith.mulf %429, %439 : vector<2x240xf32>
    %441 = arith.addf %419, %440 : vector<2x240xf32>
    %c9_294 = arith.constant 9 : index
    %c0_295 = arith.constant 0 : index
    %c1_296 = arith.constant 1 : index
    %442 = vector.load %arg5[%c9_294, %c0_295, %c1_296] : memref<25x2x256xf32, #tpu.memory_space<vmem>>, vector<1x2x240xf32>
    %443 = vector.shape_cast %442 : vector<1x2x240xf32> to vector<2x240xf32>
    %444 = arith.mulf %429, %443 : vector<2x240xf32>
    %445 = arith.addf %423, %444 : vector<2x240xf32>
    %c14_297 = arith.constant 14 : index
    %c0_298 = arith.constant 0 : index
    %c1_299 = arith.constant 1 : index
    %446 = vector.load %arg5[%c14_297, %c0_298, %c1_299] : memref<25x2x256xf32, #tpu.memory_space<vmem>>, vector<1x2x240xf32>
    %447 = vector.shape_cast %446 : vector<1x2x240xf32> to vector<2x240xf32>
    %448 = arith.mulf %429, %447 : vector<2x240xf32>
    %449 = arith.addf %427, %448 : vector<2x240xf32>
    %c20_300 = arith.constant 20 : index
    %450 = memref.load %arg1[%c20_300] : memref<30xf32, #tpu.memory_space<smem>>
    %451 = vector.broadcast %450 : f32 to vector<2x240xf32>
    %c20_301 = arith.constant 20 : index
    %c0_302 = arith.constant 0 : index
    %c0_303 = arith.constant 0 : index
    %452 = vector.load %arg5[%c20_301, %c0_302, %c0_303] : memref<25x2x256xf32, #tpu.memory_space<vmem>>, vector<1x2x240xf32>
    %453 = vector.shape_cast %452 : vector<1x2x240xf32> to vector<2x240xf32>
    %454 = arith.mulf %451, %453 : vector<2x240xf32>
    %455 = arith.addf %433, %454 : vector<2x240xf32>
    %c0_304 = arith.constant 0 : index
    %c0_305 = arith.constant 0 : index
    %c1_306 = arith.constant 1 : index
    %456 = vector.load %arg5[%c0_304, %c0_305, %c1_306] : memref<25x2x256xf32, #tpu.memory_space<vmem>>, vector<1x2x240xf32>
    %457 = vector.shape_cast %456 : vector<1x2x240xf32> to vector<2x240xf32>
    %458 = arith.mulf %451, %457 : vector<2x240xf32>
    %459 = arith.addf %437, %458 : vector<2x240xf32>
    %c5_307 = arith.constant 5 : index
    %c0_308 = arith.constant 0 : index
    %c1_309 = arith.constant 1 : index
    %460 = vector.load %arg5[%c5_307, %c0_308, %c1_309] : memref<25x2x256xf32, #tpu.memory_space<vmem>>, vector<1x2x240xf32>
    %461 = vector.shape_cast %460 : vector<1x2x240xf32> to vector<2x240xf32>
    %462 = arith.mulf %451, %461 : vector<2x240xf32>
    %463 = arith.addf %441, %462 : vector<2x240xf32>
    %c10_310 = arith.constant 10 : index
    %c0_311 = arith.constant 0 : index
    %c1_312 = arith.constant 1 : index
    %464 = vector.load %arg5[%c10_310, %c0_311, %c1_312] : memref<25x2x256xf32, #tpu.memory_space<vmem>>, vector<1x2x240xf32>
    %465 = vector.shape_cast %464 : vector<1x2x240xf32> to vector<2x240xf32>
    %466 = arith.mulf %451, %465 : vector<2x240xf32>
    %467 = arith.addf %445, %466 : vector<2x240xf32>
    %c15_313 = arith.constant 15 : index
    %c0_314 = arith.constant 0 : index
    %c1_315 = arith.constant 1 : index
    %468 = vector.load %arg5[%c15_313, %c0_314, %c1_315] : memref<25x2x256xf32, #tpu.memory_space<vmem>>, vector<1x2x240xf32>
    %469 = vector.shape_cast %468 : vector<1x2x240xf32> to vector<2x240xf32>
    %470 = arith.mulf %451, %469 : vector<2x240xf32>
    %471 = arith.addf %449, %470 : vector<2x240xf32>
    %c21_316 = arith.constant 21 : index
    %472 = memref.load %arg1[%c21_316] : memref<30xf32, #tpu.memory_space<smem>>
    %473 = vector.broadcast %472 : f32 to vector<2x240xf32>
    %c21_317 = arith.constant 21 : index
    %c0_318 = arith.constant 0 : index
    %c0_319 = arith.constant 0 : index
    %474 = vector.load %arg5[%c21_317, %c0_318, %c0_319] : memref<25x2x256xf32, #tpu.memory_space<vmem>>, vector<1x2x240xf32>
    %475 = vector.shape_cast %474 : vector<1x2x240xf32> to vector<2x240xf32>
    %476 = arith.mulf %473, %475 : vector<2x240xf32>
    %477 = arith.addf %455, %476 : vector<2x240xf32>
    %c1_320 = arith.constant 1 : index
    %c0_321 = arith.constant 0 : index
    %c1_322 = arith.constant 1 : index
    %478 = vector.load %arg5[%c1_320, %c0_321, %c1_322] : memref<25x2x256xf32, #tpu.memory_space<vmem>>, vector<1x2x240xf32>
    %479 = vector.shape_cast %478 : vector<1x2x240xf32> to vector<2x240xf32>
    %480 = arith.mulf %473, %479 : vector<2x240xf32>
    %481 = arith.addf %459, %480 : vector<2x240xf32>
    %c6_323 = arith.constant 6 : index
    %c0_324 = arith.constant 0 : index
    %c1_325 = arith.constant 1 : index
    %482 = vector.load %arg5[%c6_323, %c0_324, %c1_325] : memref<25x2x256xf32, #tpu.memory_space<vmem>>, vector<1x2x240xf32>
    %483 = vector.shape_cast %482 : vector<1x2x240xf32> to vector<2x240xf32>
    %484 = arith.mulf %473, %483 : vector<2x240xf32>
    %485 = arith.addf %463, %484 : vector<2x240xf32>
    %c11_326 = arith.constant 11 : index
    %c0_327 = arith.constant 0 : index
    %c1_328 = arith.constant 1 : index
    %486 = vector.load %arg5[%c11_326, %c0_327, %c1_328] : memref<25x2x256xf32, #tpu.memory_space<vmem>>, vector<1x2x240xf32>
    %487 = vector.shape_cast %486 : vector<1x2x240xf32> to vector<2x240xf32>
    %488 = arith.mulf %473, %487 : vector<2x240xf32>
    %489 = arith.addf %467, %488 : vector<2x240xf32>
    %c16_329 = arith.constant 16 : index
    %c0_330 = arith.constant 0 : index
    %c1_331 = arith.constant 1 : index
    %490 = vector.load %arg5[%c16_329, %c0_330, %c1_331] : memref<25x2x256xf32, #tpu.memory_space<vmem>>, vector<1x2x240xf32>
    %491 = vector.shape_cast %490 : vector<1x2x240xf32> to vector<2x240xf32>
    %492 = arith.mulf %473, %491 : vector<2x240xf32>
    %493 = arith.addf %471, %492 : vector<2x240xf32>
    %c22_332 = arith.constant 22 : index
    %494 = memref.load %arg1[%c22_332] : memref<30xf32, #tpu.memory_space<smem>>
    %495 = vector.broadcast %494 : f32 to vector<2x240xf32>
    %c22_333 = arith.constant 22 : index
    %c0_334 = arith.constant 0 : index
    %c0_335 = arith.constant 0 : index
    %496 = vector.load %arg5[%c22_333, %c0_334, %c0_335] : memref<25x2x256xf32, #tpu.memory_space<vmem>>, vector<1x2x240xf32>
    %497 = vector.shape_cast %496 : vector<1x2x240xf32> to vector<2x240xf32>
    %498 = arith.mulf %495, %497 : vector<2x240xf32>
    %499 = arith.addf %477, %498 : vector<2x240xf32>
    %c2_336 = arith.constant 2 : index
    %c0_337 = arith.constant 0 : index
    %c1_338 = arith.constant 1 : index
    %500 = vector.load %arg5[%c2_336, %c0_337, %c1_338] : memref<25x2x256xf32, #tpu.memory_space<vmem>>, vector<1x2x240xf32>
    %501 = vector.shape_cast %500 : vector<1x2x240xf32> to vector<2x240xf32>
    %502 = arith.mulf %495, %501 : vector<2x240xf32>
    %503 = arith.addf %481, %502 : vector<2x240xf32>
    %c7_339 = arith.constant 7 : index
    %c0_340 = arith.constant 0 : index
    %c1_341 = arith.constant 1 : index
    %504 = vector.load %arg5[%c7_339, %c0_340, %c1_341] : memref<25x2x256xf32, #tpu.memory_space<vmem>>, vector<1x2x240xf32>
    %505 = vector.shape_cast %504 : vector<1x2x240xf32> to vector<2x240xf32>
    %506 = arith.mulf %495, %505 : vector<2x240xf32>
    %507 = arith.addf %485, %506 : vector<2x240xf32>
    %c12_342 = arith.constant 12 : index
    %c0_343 = arith.constant 0 : index
    %c1_344 = arith.constant 1 : index
    %508 = vector.load %arg5[%c12_342, %c0_343, %c1_344] : memref<25x2x256xf32, #tpu.memory_space<vmem>>, vector<1x2x240xf32>
    %509 = vector.shape_cast %508 : vector<1x2x240xf32> to vector<2x240xf32>
    %510 = arith.mulf %495, %509 : vector<2x240xf32>
    %511 = arith.addf %489, %510 : vector<2x240xf32>
    %c17_345 = arith.constant 17 : index
    %c0_346 = arith.constant 0 : index
    %c1_347 = arith.constant 1 : index
    %512 = vector.load %arg5[%c17_345, %c0_346, %c1_347] : memref<25x2x256xf32, #tpu.memory_space<vmem>>, vector<1x2x240xf32>
    %513 = vector.shape_cast %512 : vector<1x2x240xf32> to vector<2x240xf32>
    %514 = arith.mulf %495, %513 : vector<2x240xf32>
    %515 = arith.addf %493, %514 : vector<2x240xf32>
    %c23_348 = arith.constant 23 : index
    %516 = memref.load %arg1[%c23_348] : memref<30xf32, #tpu.memory_space<smem>>
    %517 = vector.broadcast %516 : f32 to vector<2x240xf32>
    %c23_349 = arith.constant 23 : index
    %c0_350 = arith.constant 0 : index
    %c0_351 = arith.constant 0 : index
    %518 = vector.load %arg5[%c23_349, %c0_350, %c0_351] : memref<25x2x256xf32, #tpu.memory_space<vmem>>, vector<1x2x240xf32>
    %519 = vector.shape_cast %518 : vector<1x2x240xf32> to vector<2x240xf32>
    %520 = arith.mulf %517, %519 : vector<2x240xf32>
    %521 = arith.addf %499, %520 : vector<2x240xf32>
    %c3_352 = arith.constant 3 : index
    %c0_353 = arith.constant 0 : index
    %c1_354 = arith.constant 1 : index
    %522 = vector.load %arg5[%c3_352, %c0_353, %c1_354] : memref<25x2x256xf32, #tpu.memory_space<vmem>>, vector<1x2x240xf32>
    %523 = vector.shape_cast %522 : vector<1x2x240xf32> to vector<2x240xf32>
    %524 = arith.mulf %517, %523 : vector<2x240xf32>
    %525 = arith.addf %503, %524 : vector<2x240xf32>
    %c8_355 = arith.constant 8 : index
    %c0_356 = arith.constant 0 : index
    %c1_357 = arith.constant 1 : index
    %526 = vector.load %arg5[%c8_355, %c0_356, %c1_357] : memref<25x2x256xf32, #tpu.memory_space<vmem>>, vector<1x2x240xf32>
    %527 = vector.shape_cast %526 : vector<1x2x240xf32> to vector<2x240xf32>
    %528 = arith.mulf %517, %527 : vector<2x240xf32>
    %529 = arith.addf %507, %528 : vector<2x240xf32>
    %c13_358 = arith.constant 13 : index
    %c0_359 = arith.constant 0 : index
    %c1_360 = arith.constant 1 : index
    %530 = vector.load %arg5[%c13_358, %c0_359, %c1_360] : memref<25x2x256xf32, #tpu.memory_space<vmem>>, vector<1x2x240xf32>
    %531 = vector.shape_cast %530 : vector<1x2x240xf32> to vector<2x240xf32>
    %532 = arith.mulf %517, %531 : vector<2x240xf32>
    %533 = arith.addf %511, %532 : vector<2x240xf32>
    %c18_361 = arith.constant 18 : index
    %c0_362 = arith.constant 0 : index
    %c1_363 = arith.constant 1 : index
    %534 = vector.load %arg5[%c18_361, %c0_362, %c1_363] : memref<25x2x256xf32, #tpu.memory_space<vmem>>, vector<1x2x240xf32>
    %535 = vector.shape_cast %534 : vector<1x2x240xf32> to vector<2x240xf32>
    %536 = arith.mulf %517, %535 : vector<2x240xf32>
    %537 = arith.addf %515, %536 : vector<2x240xf32>
    %c24_364 = arith.constant 24 : index
    %538 = memref.load %arg1[%c24_364] : memref<30xf32, #tpu.memory_space<smem>>
    %539 = vector.broadcast %538 : f32 to vector<2x240xf32>
    %c24_365 = arith.constant 24 : index
    %c0_366 = arith.constant 0 : index
    %c0_367 = arith.constant 0 : index
    %540 = vector.load %arg5[%c24_365, %c0_366, %c0_367] : memref<25x2x256xf32, #tpu.memory_space<vmem>>, vector<1x2x240xf32>
    %541 = vector.shape_cast %540 : vector<1x2x240xf32> to vector<2x240xf32>
    %542 = arith.mulf %539, %541 : vector<2x240xf32>
    %543 = arith.addf %521, %542 : vector<2x240xf32>
    %c4_368 = arith.constant 4 : index
    %c0_369 = arith.constant 0 : index
    %c1_370 = arith.constant 1 : index
    %544 = vector.load %arg5[%c4_368, %c0_369, %c1_370] : memref<25x2x256xf32, #tpu.memory_space<vmem>>, vector<1x2x240xf32>
    %545 = vector.shape_cast %544 : vector<1x2x240xf32> to vector<2x240xf32>
    %546 = arith.mulf %539, %545 : vector<2x240xf32>
    %547 = arith.addf %525, %546 : vector<2x240xf32>
    %c9_371 = arith.constant 9 : index
    %c0_372 = arith.constant 0 : index
    %c1_373 = arith.constant 1 : index
    %548 = vector.load %arg5[%c9_371, %c0_372, %c1_373] : memref<25x2x256xf32, #tpu.memory_space<vmem>>, vector<1x2x240xf32>
    %549 = vector.shape_cast %548 : vector<1x2x240xf32> to vector<2x240xf32>
    %550 = arith.mulf %539, %549 : vector<2x240xf32>
    %551 = arith.addf %529, %550 : vector<2x240xf32>
    %c14_374 = arith.constant 14 : index
    %c0_375 = arith.constant 0 : index
    %c1_376 = arith.constant 1 : index
    %552 = vector.load %arg5[%c14_374, %c0_375, %c1_376] : memref<25x2x256xf32, #tpu.memory_space<vmem>>, vector<1x2x240xf32>
    %553 = vector.shape_cast %552 : vector<1x2x240xf32> to vector<2x240xf32>
    %554 = arith.mulf %539, %553 : vector<2x240xf32>
    %555 = arith.addf %533, %554 : vector<2x240xf32>
    %c19_377 = arith.constant 19 : index
    %c0_378 = arith.constant 0 : index
    %c1_379 = arith.constant 1 : index
    %556 = vector.load %arg5[%c19_377, %c0_378, %c1_379] : memref<25x2x256xf32, #tpu.memory_space<vmem>>, vector<1x2x240xf32>
    %557 = vector.shape_cast %556 : vector<1x2x240xf32> to vector<2x240xf32>
    %558 = arith.mulf %539, %557 : vector<2x240xf32>
    %559 = arith.addf %537, %558 : vector<2x240xf32>
    %c25 = arith.constant 25 : index
    %560 = memref.load %arg1[%c25] : memref<30xf32, #tpu.memory_space<smem>>
    %561 = vector.broadcast %560 : f32 to vector<2x240xf32>
    %c0_380 = arith.constant 0 : index
    %c0_381 = arith.constant 0 : index
    %c1_382 = arith.constant 1 : index
    %562 = vector.load %arg5[%c0_380, %c0_381, %c1_382] : memref<25x2x256xf32, #tpu.memory_space<vmem>>, vector<1x2x240xf32>
    %563 = vector.shape_cast %562 : vector<1x2x240xf32> to vector<2x240xf32>
    %564 = arith.mulf %561, %563 : vector<2x240xf32>
    %565 = arith.addf %543, %564 : vector<2x240xf32>
    %c5_383 = arith.constant 5 : index
    %c0_384 = arith.constant 0 : index
    %c1_385 = arith.constant 1 : index
    %566 = vector.load %arg5[%c5_383, %c0_384, %c1_385] : memref<25x2x256xf32, #tpu.memory_space<vmem>>, vector<1x2x240xf32>
    %567 = vector.shape_cast %566 : vector<1x2x240xf32> to vector<2x240xf32>
    %568 = arith.mulf %561, %567 : vector<2x240xf32>
    %569 = arith.addf %547, %568 : vector<2x240xf32>
    %c10_386 = arith.constant 10 : index
    %c0_387 = arith.constant 0 : index
    %c1_388 = arith.constant 1 : index
    %570 = vector.load %arg5[%c10_386, %c0_387, %c1_388] : memref<25x2x256xf32, #tpu.memory_space<vmem>>, vector<1x2x240xf32>
    %571 = vector.shape_cast %570 : vector<1x2x240xf32> to vector<2x240xf32>
    %572 = arith.mulf %561, %571 : vector<2x240xf32>
    %573 = arith.addf %551, %572 : vector<2x240xf32>
    %c15_389 = arith.constant 15 : index
    %c0_390 = arith.constant 0 : index
    %c1_391 = arith.constant 1 : index
    %574 = vector.load %arg5[%c15_389, %c0_390, %c1_391] : memref<25x2x256xf32, #tpu.memory_space<vmem>>, vector<1x2x240xf32>
    %575 = vector.shape_cast %574 : vector<1x2x240xf32> to vector<2x240xf32>
    %576 = arith.mulf %561, %575 : vector<2x240xf32>
    %577 = arith.addf %555, %576 : vector<2x240xf32>
    %c20_392 = arith.constant 20 : index
    %c0_393 = arith.constant 0 : index
    %c1_394 = arith.constant 1 : index
    %578 = vector.load %arg5[%c20_392, %c0_393, %c1_394] : memref<25x2x256xf32, #tpu.memory_space<vmem>>, vector<1x2x240xf32>
    %579 = vector.shape_cast %578 : vector<1x2x240xf32> to vector<2x240xf32>
    %580 = arith.mulf %561, %579 : vector<2x240xf32>
    %581 = arith.addf %559, %580 : vector<2x240xf32>
    %c26 = arith.constant 26 : index
    %582 = memref.load %arg1[%c26] : memref<30xf32, #tpu.memory_space<smem>>
    %583 = vector.broadcast %582 : f32 to vector<2x240xf32>
    %c1_395 = arith.constant 1 : index
    %c0_396 = arith.constant 0 : index
    %c1_397 = arith.constant 1 : index
    %584 = vector.load %arg5[%c1_395, %c0_396, %c1_397] : memref<25x2x256xf32, #tpu.memory_space<vmem>>, vector<1x2x240xf32>
    %585 = vector.shape_cast %584 : vector<1x2x240xf32> to vector<2x240xf32>
    %586 = arith.mulf %583, %585 : vector<2x240xf32>
    %587 = arith.addf %565, %586 : vector<2x240xf32>
    %c6_398 = arith.constant 6 : index
    %c0_399 = arith.constant 0 : index
    %c1_400 = arith.constant 1 : index
    %588 = vector.load %arg5[%c6_398, %c0_399, %c1_400] : memref<25x2x256xf32, #tpu.memory_space<vmem>>, vector<1x2x240xf32>
    %589 = vector.shape_cast %588 : vector<1x2x240xf32> to vector<2x240xf32>
    %590 = arith.mulf %583, %589 : vector<2x240xf32>
    %591 = arith.addf %569, %590 : vector<2x240xf32>
    %c11_401 = arith.constant 11 : index
    %c0_402 = arith.constant 0 : index
    %c1_403 = arith.constant 1 : index
    %592 = vector.load %arg5[%c11_401, %c0_402, %c1_403] : memref<25x2x256xf32, #tpu.memory_space<vmem>>, vector<1x2x240xf32>
    %593 = vector.shape_cast %592 : vector<1x2x240xf32> to vector<2x240xf32>
    %594 = arith.mulf %583, %593 : vector<2x240xf32>
    %595 = arith.addf %573, %594 : vector<2x240xf32>
    %c16_404 = arith.constant 16 : index
    %c0_405 = arith.constant 0 : index
    %c1_406 = arith.constant 1 : index
    %596 = vector.load %arg5[%c16_404, %c0_405, %c1_406] : memref<25x2x256xf32, #tpu.memory_space<vmem>>, vector<1x2x240xf32>
    %597 = vector.shape_cast %596 : vector<1x2x240xf32> to vector<2x240xf32>
    %598 = arith.mulf %583, %597 : vector<2x240xf32>
    %599 = arith.addf %577, %598 : vector<2x240xf32>
    %c21_407 = arith.constant 21 : index
    %c0_408 = arith.constant 0 : index
    %c1_409 = arith.constant 1 : index
    %600 = vector.load %arg5[%c21_407, %c0_408, %c1_409] : memref<25x2x256xf32, #tpu.memory_space<vmem>>, vector<1x2x240xf32>
    %601 = vector.shape_cast %600 : vector<1x2x240xf32> to vector<2x240xf32>
    %602 = arith.mulf %583, %601 : vector<2x240xf32>
    %603 = arith.addf %581, %602 : vector<2x240xf32>
    %c27 = arith.constant 27 : index
    %604 = memref.load %arg1[%c27] : memref<30xf32, #tpu.memory_space<smem>>
    %605 = vector.broadcast %604 : f32 to vector<2x240xf32>
    %c2_410 = arith.constant 2 : index
    %c0_411 = arith.constant 0 : index
    %c1_412 = arith.constant 1 : index
    %606 = vector.load %arg5[%c2_410, %c0_411, %c1_412] : memref<25x2x256xf32, #tpu.memory_space<vmem>>, vector<1x2x240xf32>
    %607 = vector.shape_cast %606 : vector<1x2x240xf32> to vector<2x240xf32>
    %608 = arith.mulf %605, %607 : vector<2x240xf32>
    %609 = arith.addf %587, %608 : vector<2x240xf32>
    %c7_413 = arith.constant 7 : index
    %c0_414 = arith.constant 0 : index
    %c1_415 = arith.constant 1 : index
    %610 = vector.load %arg5[%c7_413, %c0_414, %c1_415] : memref<25x2x256xf32, #tpu.memory_space<vmem>>, vector<1x2x240xf32>
    %611 = vector.shape_cast %610 : vector<1x2x240xf32> to vector<2x240xf32>
    %612 = arith.mulf %605, %611 : vector<2x240xf32>
    %613 = arith.addf %591, %612 : vector<2x240xf32>
    %c12_416 = arith.constant 12 : index
    %c0_417 = arith.constant 0 : index
    %c1_418 = arith.constant 1 : index
    %614 = vector.load %arg5[%c12_416, %c0_417, %c1_418] : memref<25x2x256xf32, #tpu.memory_space<vmem>>, vector<1x2x240xf32>
    %615 = vector.shape_cast %614 : vector<1x2x240xf32> to vector<2x240xf32>
    %616 = arith.mulf %605, %615 : vector<2x240xf32>
    %617 = arith.addf %595, %616 : vector<2x240xf32>
    %c17_419 = arith.constant 17 : index
    %c0_420 = arith.constant 0 : index
    %c1_421 = arith.constant 1 : index
    %618 = vector.load %arg5[%c17_419, %c0_420, %c1_421] : memref<25x2x256xf32, #tpu.memory_space<vmem>>, vector<1x2x240xf32>
    %619 = vector.shape_cast %618 : vector<1x2x240xf32> to vector<2x240xf32>
    %620 = arith.mulf %605, %619 : vector<2x240xf32>
    %621 = arith.addf %599, %620 : vector<2x240xf32>
    %c22_422 = arith.constant 22 : index
    %c0_423 = arith.constant 0 : index
    %c1_424 = arith.constant 1 : index
    %622 = vector.load %arg5[%c22_422, %c0_423, %c1_424] : memref<25x2x256xf32, #tpu.memory_space<vmem>>, vector<1x2x240xf32>
    %623 = vector.shape_cast %622 : vector<1x2x240xf32> to vector<2x240xf32>
    %624 = arith.mulf %605, %623 : vector<2x240xf32>
    %625 = arith.addf %603, %624 : vector<2x240xf32>
    %c28 = arith.constant 28 : index
    %626 = memref.load %arg1[%c28] : memref<30xf32, #tpu.memory_space<smem>>
    %627 = vector.broadcast %626 : f32 to vector<2x240xf32>
    %c3_425 = arith.constant 3 : index
    %c0_426 = arith.constant 0 : index
    %c1_427 = arith.constant 1 : index
    %628 = vector.load %arg5[%c3_425, %c0_426, %c1_427] : memref<25x2x256xf32, #tpu.memory_space<vmem>>, vector<1x2x240xf32>
    %629 = vector.shape_cast %628 : vector<1x2x240xf32> to vector<2x240xf32>
    %630 = arith.mulf %627, %629 : vector<2x240xf32>
    %631 = arith.addf %609, %630 : vector<2x240xf32>
    %c8_428 = arith.constant 8 : index
    %c0_429 = arith.constant 0 : index
    %c1_430 = arith.constant 1 : index
    %632 = vector.load %arg5[%c8_428, %c0_429, %c1_430] : memref<25x2x256xf32, #tpu.memory_space<vmem>>, vector<1x2x240xf32>
    %633 = vector.shape_cast %632 : vector<1x2x240xf32> to vector<2x240xf32>
    %634 = arith.mulf %627, %633 : vector<2x240xf32>
    %635 = arith.addf %613, %634 : vector<2x240xf32>
    %c13_431 = arith.constant 13 : index
    %c0_432 = arith.constant 0 : index
    %c1_433 = arith.constant 1 : index
    %636 = vector.load %arg5[%c13_431, %c0_432, %c1_433] : memref<25x2x256xf32, #tpu.memory_space<vmem>>, vector<1x2x240xf32>
    %637 = vector.shape_cast %636 : vector<1x2x240xf32> to vector<2x240xf32>
    %638 = arith.mulf %627, %637 : vector<2x240xf32>
    %639 = arith.addf %617, %638 : vector<2x240xf32>
    %c18_434 = arith.constant 18 : index
    %c0_435 = arith.constant 0 : index
    %c1_436 = arith.constant 1 : index
    %640 = vector.load %arg5[%c18_434, %c0_435, %c1_436] : memref<25x2x256xf32, #tpu.memory_space<vmem>>, vector<1x2x240xf32>
    %641 = vector.shape_cast %640 : vector<1x2x240xf32> to vector<2x240xf32>
    %642 = arith.mulf %627, %641 : vector<2x240xf32>
    %643 = arith.addf %621, %642 : vector<2x240xf32>
    %c23_437 = arith.constant 23 : index
    %c0_438 = arith.constant 0 : index
    %c1_439 = arith.constant 1 : index
    %644 = vector.load %arg5[%c23_437, %c0_438, %c1_439] : memref<25x2x256xf32, #tpu.memory_space<vmem>>, vector<1x2x240xf32>
    %645 = vector.shape_cast %644 : vector<1x2x240xf32> to vector<2x240xf32>
    %646 = arith.mulf %627, %645 : vector<2x240xf32>
    %647 = arith.addf %625, %646 : vector<2x240xf32>
    %c29 = arith.constant 29 : index
    %648 = memref.load %arg1[%c29] : memref<30xf32, #tpu.memory_space<smem>>
    %649 = vector.broadcast %648 : f32 to vector<2x240xf32>
    %c4_440 = arith.constant 4 : index
    %c0_441 = arith.constant 0 : index
    %c1_442 = arith.constant 1 : index
    %650 = vector.load %arg5[%c4_440, %c0_441, %c1_442] : memref<25x2x256xf32, #tpu.memory_space<vmem>>, vector<1x2x240xf32>
    %651 = vector.shape_cast %650 : vector<1x2x240xf32> to vector<2x240xf32>
    %652 = arith.mulf %649, %651 : vector<2x240xf32>
    %653 = arith.addf %631, %652 : vector<2x240xf32>
    %c9_443 = arith.constant 9 : index
    %c0_444 = arith.constant 0 : index
    %c1_445 = arith.constant 1 : index
    %654 = vector.load %arg5[%c9_443, %c0_444, %c1_445] : memref<25x2x256xf32, #tpu.memory_space<vmem>>, vector<1x2x240xf32>
    %655 = vector.shape_cast %654 : vector<1x2x240xf32> to vector<2x240xf32>
    %656 = arith.mulf %649, %655 : vector<2x240xf32>
    %657 = arith.addf %635, %656 : vector<2x240xf32>
    %c14_446 = arith.constant 14 : index
    %c0_447 = arith.constant 0 : index
    %c1_448 = arith.constant 1 : index
    %658 = vector.load %arg5[%c14_446, %c0_447, %c1_448] : memref<25x2x256xf32, #tpu.memory_space<vmem>>, vector<1x2x240xf32>
    %659 = vector.shape_cast %658 : vector<1x2x240xf32> to vector<2x240xf32>
    %660 = arith.mulf %649, %659 : vector<2x240xf32>
    %661 = arith.addf %639, %660 : vector<2x240xf32>
    %c19_449 = arith.constant 19 : index
    %c0_450 = arith.constant 0 : index
    %c1_451 = arith.constant 1 : index
    %662 = vector.load %arg5[%c19_449, %c0_450, %c1_451] : memref<25x2x256xf32, #tpu.memory_space<vmem>>, vector<1x2x240xf32>
    %663 = vector.shape_cast %662 : vector<1x2x240xf32> to vector<2x240xf32>
    %664 = arith.mulf %649, %663 : vector<2x240xf32>
    %665 = arith.addf %643, %664 : vector<2x240xf32>
    %c24_452 = arith.constant 24 : index
    %c0_453 = arith.constant 0 : index
    %c1_454 = arith.constant 1 : index
    %666 = vector.load %arg5[%c24_452, %c0_453, %c1_454] : memref<25x2x256xf32, #tpu.memory_space<vmem>>, vector<1x2x240xf32>
    %667 = vector.shape_cast %666 : vector<1x2x240xf32> to vector<2x240xf32>
    %668 = arith.mulf %649, %667 : vector<2x240xf32>
    %669 = arith.addf %647, %668 : vector<2x240xf32>
    %cst = arith.constant 0.000000e+00 : f32
    %670 = vector.broadcast %cst : f32 to vector<2x240xf32>
    %671 = arith.maximumf %653, %670 : vector<2x240xf32>
    %c0_455 = arith.constant 0 : index
    %c0_456 = arith.constant 0 : index
    %c0_457 = arith.constant 0 : index
    %672 = vector.load %arg9[%c0_455, %c0_456, %c0_457] : memref<5x2x256xf32, #tpu.memory_space<vmem>>, vector<1x2x240xf32>
    %673 = vector.shape_cast %672 : vector<1x2x240xf32> to vector<2x240xf32>
    %674 = vector.shape_cast %671 : vector<2x240xf32> to vector<1x2x240xf32>
    tpu.vector_store %arg9[%c0_455, %c0_456, %c0_457], %674 {strides = array<i32>} : memref<5x2x256xf32, #tpu.memory_space<vmem>>, vector<1x2x240xf32>,
    %cst_458 = arith.constant 0.000000e+00 : f32
    %675 = vector.broadcast %cst_458 : f32 to vector<2x240xf32>
    %676 = arith.maximumf %657, %675 : vector<2x240xf32>
    %c1_459 = arith.constant 1 : index
    %c0_460 = arith.constant 0 : index
    %c0_461 = arith.constant 0 : index
    %677 = vector.load %arg9[%c1_459, %c0_460, %c0_461] : memref<5x2x256xf32, #tpu.memory_space<vmem>>, vector<1x2x240xf32>
    %678 = vector.shape_cast %677 : vector<1x2x240xf32> to vector<2x240xf32>
    %679 = vector.shape_cast %676 : vector<2x240xf32> to vector<1x2x240xf32>
    tpu.vector_store %arg9[%c1_459, %c0_460, %c0_461], %679 {strides = array<i32>} : memref<5x2x256xf32, #tpu.memory_space<vmem>>, vector<1x2x240xf32>,
    %cst_462 = arith.constant 0.000000e+00 : f32
    %680 = vector.broadcast %cst_462 : f32 to vector<2x240xf32>
    %681 = arith.maximumf %661, %680 : vector<2x240xf32>
    %c2_463 = arith.constant 2 : index
    %c0_464 = arith.constant 0 : index
    %c0_465 = arith.constant 0 : index
    %682 = vector.load %arg9[%c2_463, %c0_464, %c0_465] : memref<5x2x256xf32, #tpu.memory_space<vmem>>, vector<1x2x240xf32>
    %683 = vector.shape_cast %682 : vector<1x2x240xf32> to vector<2x240xf32>
    %684 = vector.shape_cast %681 : vector<2x240xf32> to vector<1x2x240xf32>
    tpu.vector_store %arg9[%c2_463, %c0_464, %c0_465], %684 {strides = array<i32>} : memref<5x2x256xf32, #tpu.memory_space<vmem>>, vector<1x2x240xf32>,
    %cst_466 = arith.constant 0.000000e+00 : f32
    %685 = vector.broadcast %cst_466 : f32 to vector<2x240xf32>
    %686 = arith.maximumf %665, %685 : vector<2x240xf32>
    %c3_467 = arith.constant 3 : index
    %c0_468 = arith.constant 0 : index
    %c0_469 = arith.constant 0 : index
    %687 = vector.load %arg9[%c3_467, %c0_468, %c0_469] : memref<5x2x256xf32, #tpu.memory_space<vmem>>, vector<1x2x240xf32>
    %688 = vector.shape_cast %687 : vector<1x2x240xf32> to vector<2x240xf32>
    %689 = vector.shape_cast %686 : vector<2x240xf32> to vector<1x2x240xf32>
    tpu.vector_store %arg9[%c3_467, %c0_468, %c0_469], %689 {strides = array<i32>} : memref<5x2x256xf32, #tpu.memory_space<vmem>>, vector<1x2x240xf32>,
    %cst_470 = arith.constant 0.000000e+00 : f32
    %690 = vector.broadcast %cst_470 : f32 to vector<2x240xf32>
    %691 = arith.maximumf %669, %690 : vector<2x240xf32>
    %c4_471 = arith.constant 4 : index
    %c0_472 = arith.constant 0 : index
    %c0_473 = arith.constant 0 : index
    %692 = vector.load %arg9[%c4_471, %c0_472, %c0_473] : memref<5x2x256xf32, #tpu.memory_space<vmem>>, vector<1x2x240xf32>
    %693 = vector.shape_cast %692 : vector<1x2x240xf32> to vector<2x240xf32>
    %694 = vector.shape_cast %691 : vector<2x240xf32> to vector<1x2x240xf32>
    tpu.vector_store %arg9[%c4_471, %c0_472, %c0_473], %694 {strides = array<i32>} : memref<5x2x256xf32, #tpu.memory_space<vmem>>, vector<1x2x240xf32>,
    %c0_474 = arith.constant 0 : index
    %695 = memref.load %arg3[%c0_474] : memref<30xf32, #tpu.memory_space<smem>>
    %c0_475 = arith.constant 0 : index
    %c0_476 = arith.constant 0 : index
    %c0_477 = arith.constant 0 : index
    %696 = vector.load %arg9[%c0_475, %c0_476, %c0_477] : memref<5x2x256xf32, #tpu.memory_space<vmem>>, vector<1x2x234xf32>
    %697 = vector.shape_cast %696 : vector<1x2x234xf32> to vector<2x234xf32>
    %698 = vector.broadcast %695 : f32 to vector<2x234xf32>
    %699 = arith.mulf %698, %697 : vector<2x234xf32>
    %c1_478 = arith.constant 1 : index
    %700 = memref.load %arg3[%c1_478] : memref<30xf32, #tpu.memory_space<smem>>
    %c1_479 = arith.constant 1 : index
    %c0_480 = arith.constant 0 : index
    %c0_481 = arith.constant 0 : index
    %701 = vector.load %arg9[%c1_479, %c0_480, %c0_481] : memref<5x2x256xf32, #tpu.memory_space<vmem>>, vector<1x2x234xf32>
    %702 = vector.shape_cast %701 : vector<1x2x234xf32> to vector<2x234xf32>
    %703 = vector.broadcast %700 : f32 to vector<2x234xf32>
    %704 = arith.mulf %703, %702 : vector<2x234xf32>
    %705 = arith.addf %699, %704 : vector<2x234xf32>
    %c2_482 = arith.constant 2 : index
    %706 = memref.load %arg3[%c2_482] : memref<30xf32, #tpu.memory_space<smem>>
    %c2_483 = arith.constant 2 : index
    %c0_484 = arith.constant 0 : index
    %c0_485 = arith.constant 0 : index
    %707 = vector.load %arg9[%c2_483, %c0_484, %c0_485] : memref<5x2x256xf32, #tpu.memory_space<vmem>>, vector<1x2x234xf32>
    %708 = vector.shape_cast %707 : vector<1x2x234xf32> to vector<2x234xf32>
    %709 = vector.broadcast %706 : f32 to vector<2x234xf32>
    %710 = arith.mulf %709, %708 : vector<2x234xf32>
    %711 = arith.addf %705, %710 : vector<2x234xf32>
    %c3_486 = arith.constant 3 : index
    %712 = memref.load %arg3[%c3_486] : memref<30xf32, #tpu.memory_space<smem>>
    %c3_487 = arith.constant 3 : index
    %c0_488 = arith.constant 0 : index
    %c0_489 = arith.constant 0 : index
    %713 = vector.load %arg9[%c3_487, %c0_488, %c0_489] : memref<5x2x256xf32, #tpu.memory_space<vmem>>, vector<1x2x234xf32>
    %714 = vector.shape_cast %713 : vector<1x2x234xf32> to vector<2x234xf32>
    %715 = vector.broadcast %712 : f32 to vector<2x234xf32>
    %716 = arith.mulf %715, %714 : vector<2x234xf32>
    %717 = arith.addf %711, %716 : vector<2x234xf32>
    %c4_490 = arith.constant 4 : index
    %718 = memref.load %arg3[%c4_490] : memref<30xf32, #tpu.memory_space<smem>>
    %c4_491 = arith.constant 4 : index
    %c0_492 = arith.constant 0 : index
    %c0_493 = arith.constant 0 : index
    %719 = vector.load %arg9[%c4_491, %c0_492, %c0_493] : memref<5x2x256xf32, #tpu.memory_space<vmem>>, vector<1x2x234xf32>
    %720 = vector.shape_cast %719 : vector<1x2x234xf32> to vector<2x234xf32>
    %721 = vector.broadcast %718 : f32 to vector<2x234xf32>
    %722 = arith.mulf %721, %720 : vector<2x234xf32>
    %723 = arith.addf %717, %722 : vector<2x234xf32>
    %c5_494 = arith.constant 5 : index
    %724 = memref.load %arg3[%c5_494] : memref<30xf32, #tpu.memory_space<smem>>
    %c0_495 = arith.constant 0 : index
    %c0_496 = arith.constant 0 : index
    %c1_497 = arith.constant 1 : index
    %725 = vector.load %arg9[%c0_495, %c0_496, %c1_497] : memref<5x2x256xf32, #tpu.memory_space<vmem>>, vector<1x2x234xf32>
    %726 = vector.shape_cast %725 : vector<1x2x234xf32> to vector<2x234xf32>
    %727 = vector.broadcast %724 : f32 to vector<2x234xf32>
    %728 = arith.mulf %727, %726 : vector<2x234xf32>
    %c6_498 = arith.constant 6 : index
    %729 = memref.load %arg3[%c6_498] : memref<30xf32, #tpu.memory_space<smem>>
    %c1_499 = arith.constant 1 : index
    %c0_500 = arith.constant 0 : index
    %c1_501 = arith.constant 1 : index
    %730 = vector.load %arg9[%c1_499, %c0_500, %c1_501] : memref<5x2x256xf32, #tpu.memory_space<vmem>>, vector<1x2x234xf32>
    %731 = vector.shape_cast %730 : vector<1x2x234xf32> to vector<2x234xf32>
    %732 = vector.broadcast %729 : f32 to vector<2x234xf32>
    %733 = arith.mulf %732, %731 : vector<2x234xf32>
    %734 = arith.addf %728, %733 : vector<2x234xf32>
    %c7_502 = arith.constant 7 : index
    %735 = memref.load %arg3[%c7_502] : memref<30xf32, #tpu.memory_space<smem>>
    %c2_503 = arith.constant 2 : index
    %c0_504 = arith.constant 0 : index
    %c1_505 = arith.constant 1 : index
    %736 = vector.load %arg9[%c2_503, %c0_504, %c1_505] : memref<5x2x256xf32, #tpu.memory_space<vmem>>, vector<1x2x234xf32>
    %737 = vector.shape_cast %736 : vector<1x2x234xf32> to vector<2x234xf32>
    %738 = vector.broadcast %735 : f32 to vector<2x234xf32>
    %739 = arith.mulf %738, %737 : vector<2x234xf32>
    %740 = arith.addf %734, %739 : vector<2x234xf32>
    %c8_506 = arith.constant 8 : index
    %741 = memref.load %arg3[%c8_506] : memref<30xf32, #tpu.memory_space<smem>>
    %c3_507 = arith.constant 3 : index
    %c0_508 = arith.constant 0 : index
    %c1_509 = arith.constant 1 : index
    %742 = vector.load %arg9[%c3_507, %c0_508, %c1_509] : memref<5x2x256xf32, #tpu.memory_space<vmem>>, vector<1x2x234xf32>
    %743 = vector.shape_cast %742 : vector<1x2x234xf32> to vector<2x234xf32>
    %744 = vector.broadcast %741 : f32 to vector<2x234xf32>
    %745 = arith.mulf %744, %743 : vector<2x234xf32>
    %746 = arith.addf %740, %745 : vector<2x234xf32>
    %c9_510 = arith.constant 9 : index
    %747 = memref.load %arg3[%c9_510] : memref<30xf32, #tpu.memory_space<smem>>
    %c4_511 = arith.constant 4 : index
    %c0_512 = arith.constant 0 : index
    %c1_513 = arith.constant 1 : index
    %748 = vector.load %arg9[%c4_511, %c0_512, %c1_513] : memref<5x2x256xf32, #tpu.memory_space<vmem>>, vector<1x2x234xf32>
    %749 = vector.shape_cast %748 : vector<1x2x234xf32> to vector<2x234xf32>
    %750 = vector.broadcast %747 : f32 to vector<2x234xf32>
    %751 = arith.mulf %750, %749 : vector<2x234xf32>
    %752 = arith.addf %746, %751 : vector<2x234xf32>
    %c10_514 = arith.constant 10 : index
    %753 = memref.load %arg3[%c10_514] : memref<30xf32, #tpu.memory_space<smem>>
    %c0_515 = arith.constant 0 : index
    %c0_516 = arith.constant 0 : index
    %c2_517 = arith.constant 2 : index
    %754 = vector.load %arg9[%c0_515, %c0_516, %c2_517] : memref<5x2x256xf32, #tpu.memory_space<vmem>>, vector<1x2x234xf32>
    %755 = vector.shape_cast %754 : vector<1x2x234xf32> to vector<2x234xf32>
    %756 = vector.broadcast %753 : f32 to vector<2x234xf32>
    %757 = arith.mulf %756, %755 : vector<2x234xf32>
    %c11_518 = arith.constant 11 : index
    %758 = memref.load %arg3[%c11_518] : memref<30xf32, #tpu.memory_space<smem>>
    %c1_519 = arith.constant 1 : index
    %c0_520 = arith.constant 0 : index
    %c2_521 = arith.constant 2 : index
    %759 = vector.load %arg9[%c1_519, %c0_520, %c2_521] : memref<5x2x256xf32, #tpu.memory_space<vmem>>, vector<1x2x234xf32>
    %760 = vector.shape_cast %759 : vector<1x2x234xf32> to vector<2x234xf32>
    %761 = vector.broadcast %758 : f32 to vector<2x234xf32>
    %762 = arith.mulf %761, %760 : vector<2x234xf32>
    %763 = arith.addf %757, %762 : vector<2x234xf32>
    %c12_522 = arith.constant 12 : index
    %764 = memref.load %arg3[%c12_522] : memref<30xf32, #tpu.memory_space<smem>>
    %c2_523 = arith.constant 2 : index
    %c0_524 = arith.constant 0 : index
    %c2_525 = arith.constant 2 : index
    %765 = vector.load %arg9[%c2_523, %c0_524, %c2_525] : memref<5x2x256xf32, #tpu.memory_space<vmem>>, vector<1x2x234xf32>
    %766 = vector.shape_cast %765 : vector<1x2x234xf32> to vector<2x234xf32>
    %767 = vector.broadcast %764 : f32 to vector<2x234xf32>
    %768 = arith.mulf %767, %766 : vector<2x234xf32>
    %769 = arith.addf %763, %768 : vector<2x234xf32>
    %c13_526 = arith.constant 13 : index
    %770 = memref.load %arg3[%c13_526] : memref<30xf32, #tpu.memory_space<smem>>
    %c3_527 = arith.constant 3 : index
    %c0_528 = arith.constant 0 : index
    %c2_529 = arith.constant 2 : index
    %771 = vector.load %arg9[%c3_527, %c0_528, %c2_529] : memref<5x2x256xf32, #tpu.memory_space<vmem>>, vector<1x2x234xf32>
    %772 = vector.shape_cast %771 : vector<1x2x234xf32> to vector<2x234xf32>
    %773 = vector.broadcast %770 : f32 to vector<2x234xf32>
    %774 = arith.mulf %773, %772 : vector<2x234xf32>
    %775 = arith.addf %769, %774 : vector<2x234xf32>
    %c14_530 = arith.constant 14 : index
    %776 = memref.load %arg3[%c14_530] : memref<30xf32, #tpu.memory_space<smem>>
    %c4_531 = arith.constant 4 : index
    %c0_532 = arith.constant 0 : index
    %c2_533 = arith.constant 2 : index
    %777 = vector.load %arg9[%c4_531, %c0_532, %c2_533] : memref<5x2x256xf32, #tpu.memory_space<vmem>>, vector<1x2x234xf32>
    %778 = vector.shape_cast %777 : vector<1x2x234xf32> to vector<2x234xf32>
    %779 = vector.broadcast %776 : f32 to vector<2x234xf32>
    %780 = arith.mulf %779, %778 : vector<2x234xf32>
    %781 = arith.addf %775, %780 : vector<2x234xf32>
    %c15_534 = arith.constant 15 : index
    %782 = memref.load %arg3[%c15_534] : memref<30xf32, #tpu.memory_space<smem>>
    %c0_535 = arith.constant 0 : index
    %c0_536 = arith.constant 0 : index
    %c3_537 = arith.constant 3 : index
    %783 = vector.load %arg9[%c0_535, %c0_536, %c3_537] : memref<5x2x256xf32, #tpu.memory_space<vmem>>, vector<1x2x234xf32>
    %784 = vector.shape_cast %783 : vector<1x2x234xf32> to vector<2x234xf32>
    %785 = vector.broadcast %782 : f32 to vector<2x234xf32>
    %786 = arith.mulf %785, %784 : vector<2x234xf32>
    %c16_538 = arith.constant 16 : index
    %787 = memref.load %arg3[%c16_538] : memref<30xf32, #tpu.memory_space<smem>>
    %c1_539 = arith.constant 1 : index
    %c0_540 = arith.constant 0 : index
    %c3_541 = arith.constant 3 : index
    %788 = vector.load %arg9[%c1_539, %c0_540, %c3_541] : memref<5x2x256xf32, #tpu.memory_space<vmem>>, vector<1x2x234xf32>
    %789 = vector.shape_cast %788 : vector<1x2x234xf32> to vector<2x234xf32>
    %790 = vector.broadcast %787 : f32 to vector<2x234xf32>
    %791 = arith.mulf %790, %789 : vector<2x234xf32>
    %792 = arith.addf %786, %791 : vector<2x234xf32>
    %c17_542 = arith.constant 17 : index
    %793 = memref.load %arg3[%c17_542] : memref<30xf32, #tpu.memory_space<smem>>
    %c2_543 = arith.constant 2 : index
    %c0_544 = arith.constant 0 : index
    %c3_545 = arith.constant 3 : index
    %794 = vector.load %arg9[%c2_543, %c0_544, %c3_545] : memref<5x2x256xf32, #tpu.memory_space<vmem>>, vector<1x2x234xf32>
    %795 = vector.shape_cast %794 : vector<1x2x234xf32> to vector<2x234xf32>
    %796 = vector.broadcast %793 : f32 to vector<2x234xf32>
    %797 = arith.mulf %796, %795 : vector<2x234xf32>
    %798 = arith.addf %792, %797 : vector<2x234xf32>
    %c18_546 = arith.constant 18 : index
    %799 = memref.load %arg3[%c18_546] : memref<30xf32, #tpu.memory_space<smem>>
    %c3_547 = arith.constant 3 : index
    %c0_548 = arith.constant 0 : index
    %c3_549 = arith.constant 3 : index
    %800 = vector.load %arg9[%c3_547, %c0_548, %c3_549] : memref<5x2x256xf32, #tpu.memory_space<vmem>>, vector<1x2x234xf32>
    %801 = vector.shape_cast %800 : vector<1x2x234xf32> to vector<2x234xf32>
    %802 = vector.broadcast %799 : f32 to vector<2x234xf32>
    %803 = arith.mulf %802, %801 : vector<2x234xf32>
    %804 = arith.addf %798, %803 : vector<2x234xf32>
    %c19_550 = arith.constant 19 : index
    %805 = memref.load %arg3[%c19_550] : memref<30xf32, #tpu.memory_space<smem>>
    %c4_551 = arith.constant 4 : index
    %c0_552 = arith.constant 0 : index
    %c3_553 = arith.constant 3 : index
    %806 = vector.load %arg9[%c4_551, %c0_552, %c3_553] : memref<5x2x256xf32, #tpu.memory_space<vmem>>, vector<1x2x234xf32>
    %807 = vector.shape_cast %806 : vector<1x2x234xf32> to vector<2x234xf32>
    %808 = vector.broadcast %805 : f32 to vector<2x234xf32>
    %809 = arith.mulf %808, %807 : vector<2x234xf32>
    %810 = arith.addf %804, %809 : vector<2x234xf32>
    %c20_554 = arith.constant 20 : index
    %811 = memref.load %arg3[%c20_554] : memref<30xf32, #tpu.memory_space<smem>>
    %c0_555 = arith.constant 0 : index
    %c0_556 = arith.constant 0 : index
    %c4_557 = arith.constant 4 : index
    %812 = vector.load %arg9[%c0_555, %c0_556, %c4_557] : memref<5x2x256xf32, #tpu.memory_space<vmem>>, vector<1x2x234xf32>
    %813 = vector.shape_cast %812 : vector<1x2x234xf32> to vector<2x234xf32>
    %814 = vector.broadcast %811 : f32 to vector<2x234xf32>
    %815 = arith.mulf %814, %813 : vector<2x234xf32>
    %c21_558 = arith.constant 21 : index
    %816 = memref.load %arg3[%c21_558] : memref<30xf32, #tpu.memory_space<smem>>
    %c1_559 = arith.constant 1 : index
    %c0_560 = arith.constant 0 : index
    %c4_561 = arith.constant 4 : index
    %817 = vector.load %arg9[%c1_559, %c0_560, %c4_561] : memref<5x2x256xf32, #tpu.memory_space<vmem>>, vector<1x2x234xf32>
    %818 = vector.shape_cast %817 : vector<1x2x234xf32> to vector<2x234xf32>
    %819 = vector.broadcast %816 : f32 to vector<2x234xf32>
    %820 = arith.mulf %819, %818 : vector<2x234xf32>
    %821 = arith.addf %815, %820 : vector<2x234xf32>
    %c22_562 = arith.constant 22 : index
    %822 = memref.load %arg3[%c22_562] : memref<30xf32, #tpu.memory_space<smem>>
    %c2_563 = arith.constant 2 : index
    %c0_564 = arith.constant 0 : index
    %c4_565 = arith.constant 4 : index
    %823 = vector.load %arg9[%c2_563, %c0_564, %c4_565] : memref<5x2x256xf32, #tpu.memory_space<vmem>>, vector<1x2x234xf32>
    %824 = vector.shape_cast %823 : vector<1x2x234xf32> to vector<2x234xf32>
    %825 = vector.broadcast %822 : f32 to vector<2x234xf32>
    %826 = arith.mulf %825, %824 : vector<2x234xf32>
    %827 = arith.addf %821, %826 : vector<2x234xf32>
    %c23_566 = arith.constant 23 : index
    %828 = memref.load %arg3[%c23_566] : memref<30xf32, #tpu.memory_space<smem>>
    %c3_567 = arith.constant 3 : index
    %c0_568 = arith.constant 0 : index
    %c4_569 = arith.constant 4 : index
    %829 = vector.load %arg9[%c3_567, %c0_568, %c4_569] : memref<5x2x256xf32, #tpu.memory_space<vmem>>, vector<1x2x234xf32>
    %830 = vector.shape_cast %829 : vector<1x2x234xf32> to vector<2x234xf32>
    %831 = vector.broadcast %828 : f32 to vector<2x234xf32>
    %832 = arith.mulf %831, %830 : vector<2x234xf32>
    %833 = arith.addf %827, %832 : vector<2x234xf32>
    %c24_570 = arith.constant 24 : index
    %834 = memref.load %arg3[%c24_570] : memref<30xf32, #tpu.memory_space<smem>>
    %c4_571 = arith.constant 4 : index
    %c0_572 = arith.constant 0 : index
    %c4_573 = arith.constant 4 : index
    %835 = vector.load %arg9[%c4_571, %c0_572, %c4_573] : memref<5x2x256xf32, #tpu.memory_space<vmem>>, vector<1x2x234xf32>
    %836 = vector.shape_cast %835 : vector<1x2x234xf32> to vector<2x234xf32>
    %837 = vector.broadcast %834 : f32 to vector<2x234xf32>
    %838 = arith.mulf %837, %836 : vector<2x234xf32>
    %839 = arith.addf %833, %838 : vector<2x234xf32>
    %c25_574 = arith.constant 25 : index
    %840 = memref.load %arg3[%c25_574] : memref<30xf32, #tpu.memory_space<smem>>
    %c0_575 = arith.constant 0 : index
    %c0_576 = arith.constant 0 : index
    %c5_577 = arith.constant 5 : index
    %841 = vector.load %arg9[%c0_575, %c0_576, %c5_577] : memref<5x2x256xf32, #tpu.memory_space<vmem>>, vector<1x2x234xf32>
    %842 = vector.shape_cast %841 : vector<1x2x234xf32> to vector<2x234xf32>
    %843 = vector.broadcast %840 : f32 to vector<2x234xf32>
    %844 = arith.mulf %843, %842 : vector<2x234xf32>
    %c26_578 = arith.constant 26 : index
    %845 = memref.load %arg3[%c26_578] : memref<30xf32, #tpu.memory_space<smem>>
    %c1_579 = arith.constant 1 : index
    %c0_580 = arith.constant 0 : index
    %c5_581 = arith.constant 5 : index
    %846 = vector.load %arg9[%c1_579, %c0_580, %c5_581] : memref<5x2x256xf32, #tpu.memory_space<vmem>>, vector<1x2x234xf32>
    %847 = vector.shape_cast %846 : vector<1x2x234xf32> to vector<2x234xf32>
    %848 = vector.broadcast %845 : f32 to vector<2x234xf32>
    %849 = arith.mulf %848, %847 : vector<2x234xf32>
    %850 = arith.addf %844, %849 : vector<2x234xf32>
    %c27_582 = arith.constant 27 : index
    %851 = memref.load %arg3[%c27_582] : memref<30xf32, #tpu.memory_space<smem>>
    %c2_583 = arith.constant 2 : index
    %c0_584 = arith.constant 0 : index
    %c5_585 = arith.constant 5 : index
    %852 = vector.load %arg9[%c2_583, %c0_584, %c5_585] : memref<5x2x256xf32, #tpu.memory_space<vmem>>, vector<1x2x234xf32>
    %853 = vector.shape_cast %852 : vector<1x2x234xf32> to vector<2x234xf32>
    %854 = vector.broadcast %851 : f32 to vector<2x234xf32>
    %855 = arith.mulf %854, %853 : vector<2x234xf32>
    %856 = arith.addf %850, %855 : vector<2x234xf32>
    %c28_586 = arith.constant 28 : index
    %857 = memref.load %arg3[%c28_586] : memref<30xf32, #tpu.memory_space<smem>>
    %c3_587 = arith.constant 3 : index
    %c0_588 = arith.constant 0 : index
    %c5_589 = arith.constant 5 : index
    %858 = vector.load %arg9[%c3_587, %c0_588, %c5_589] : memref<5x2x256xf32, #tpu.memory_space<vmem>>, vector<1x2x234xf32>
    %859 = vector.shape_cast %858 : vector<1x2x234xf32> to vector<2x234xf32>
    %860 = vector.broadcast %857 : f32 to vector<2x234xf32>
    %861 = arith.mulf %860, %859 : vector<2x234xf32>
    %862 = arith.addf %856, %861 : vector<2x234xf32>
    %c29_590 = arith.constant 29 : index
    %863 = memref.load %arg3[%c29_590] : memref<30xf32, #tpu.memory_space<smem>>
    %c4_591 = arith.constant 4 : index
    %c0_592 = arith.constant 0 : index
    %c5_593 = arith.constant 5 : index
    %864 = vector.load %arg9[%c4_591, %c0_592, %c5_593] : memref<5x2x256xf32, #tpu.memory_space<vmem>>, vector<1x2x234xf32>
    %865 = vector.shape_cast %864 : vector<1x2x234xf32> to vector<2x234xf32>
    %866 = vector.broadcast %863 : f32 to vector<2x234xf32>
    %867 = arith.mulf %866, %865 : vector<2x234xf32>
    %868 = arith.addf %862, %867 : vector<2x234xf32>
    %869 = arith.addf %723, %752 : vector<2x234xf32>
    %870 = arith.addf %781, %810 : vector<2x234xf32>
    %871 = arith.addf %869, %870 : vector<2x234xf32>
    %872 = arith.addf %839, %868 : vector<2x234xf32>
    %873 = arith.addf %871, %872 : vector<2x234xf32>
    %c0_594 = arith.constant 0 : index
    %874 = memref.load %arg4[%c0_594] : memref<1xf32, #tpu.memory_space<smem>>
    %875 = vector.broadcast %874 : f32 to vector<2x234xf32>
    %876 = arith.addf %873, %875 : vector<2x234xf32>
    %cst_595 = arith.constant 0.000000e+00 : f32
    %877 = vector.broadcast %cst_595 : f32 to vector<2x234xf32>
    %878 = arith.maximumf %876, %877 : vector<2x234xf32>
    %c0_596 = arith.constant 0 : index
    %c0_597 = arith.constant 0 : index
    %879 = vector.load %arg6[%c0_596, %c0_597] : memref<234x5xf32, #tpu.memory_space<vmem>>, vector<234x5xf32>
    %cst_598 = arith.constant dense<0.000000e+00> : vector<2x5xf32>
    %880 = tpu.matmul %878, %879, %cst_598 {dimension_numbers = #tpu.dot_dimension_numbers<[1], [0], [0], [1], [0, 0, 1, 1], [], []>} : vector<2x234xf32>, vector<234x5xf32>, vector<2x5xf32> -> vector<2x5xf32>
    %c0_599 = arith.constant 0 : index
    %c0_600 = arith.constant 0 : index
    %881 = vector.load %arg7[%c0_599, %c0_600] : memref<1x5xf32, #tpu.memory_space<vmem>>, vector<1x5xf32>
    %882 = vector.broadcast %881 : vector<1x5xf32> to vector<2x5xf32>
    %883 = arith.addf %880, %882 : vector<2x5xf32>
    %c0_601 = arith.constant 0 : index
    %c0_602 = arith.constant 0 : index
    %884 = vector.load %arg8[%c0_601, %c0_602] : memref<2x5xf32, #tpu.memory_space<vmem>>, vector<2x5xf32>
    tpu.vector_store %arg8[%c0_601, %c0_602], %883 {strides = array<i32>} : memref<2x5xf32, #tpu.memory_space<vmem>>, vector<2x5xf32>,
    return
  }
  func.func @transform_0(%arg0: i32) -> i32 {
    %c0_i32 = arith.constant 0 : i32
    %c0_i32_0 = arith.constant 0 : i32
    return %c0_i32 : i32
  }
  func.func @transform_1(%arg0: i32) -> i32 {
    %c0_i32 = arith.constant 0 : i32
    %c0_i32_0 = arith.constant 0 : i32
    return %c0_i32 : i32
  }
  func.func @transform_2(%arg0: i32) -> i32 {
    %c0_i32 = arith.constant 0 : i32
    %c0_i32_0 = arith.constant 0 : i32
    return %c0_i32 : i32
  }
  func.func @transform_3(%arg0: i32) -> i32 {
    %c0_i32 = arith.constant 0 : i32
    %c0_i32_0 = arith.constant 0 : i32
    return %c0_i32 : i32
  }
  func.func @transform_4(%arg0: i32) -> (i32, i32, i32) {
    %c0_i32 = arith.constant 0 : i32
    %c0_i32_0 = arith.constant 0 : i32
    %c0_i32_1 = arith.constant 0 : i32
    return %c0_i32, %arg0, %c0_i32_0 : i32, i32, i32
  }
  func.func @transform_5(%arg0: i32) -> (i32, i32) {
    %c0_i32 = arith.constant 0 : i32
    %c0_i32_0 = arith.constant 0 : i32
    %c0_i32_1 = arith.constant 0 : i32
    return %c0_i32, %c0_i32_0 : i32, i32
  }
  func.func @transform_6(%arg0: i32) -> (i32, i32) {
    %c0_i32 = arith.constant 0 : i32
    %c0_i32_0 = arith.constant 0 : i32
    %c0_i32_1 = arith.constant 0 : i32
    return %c0_i32, %c0_i32_0 : i32, i32
  }
  func.func @transform_7(%arg0: i32) -> (i32, i32) {
    %c0_i32 = arith.constant 0 : i32
    %c0_i32_0 = arith.constant 0 : i32
    return %arg0, %c0_i32 : i32, i32
  }
}

</mosaic_0001>

<llo_original>
// kernel: tpu_custom_call.1
$region0: #{tpu_custom_call.1}
  #allocation0 [shape = 'u32[]', space=smem, size = 0x4, offset = 0x4, fixed_abs, tag = 'smem constant byte address 0x4 - core index']
  #allocation1 [shape = 'u32[72,128]{1,0:T(1,128)}', space=vmem, size = 0x9000, scoped, tag = 'internal scratch']
  #allocation2 [shape = 'f32[5,2,256]{2,1,0:T(2,128)}', space=vmem, size = 0x2800, scoped, tag = 'scratch operand']
  #allocation3 [shape = 'f32[1]{0:T(128)S(6)}', space=smem, size = 0x200, scoped, tag = 'scoped memory for tpu_custom_call.1']
  #allocation4 [shape = 'f32[1]{0:T(128)S(6)}', space=smem, size = 0x200, scoped, tag = 'scoped memory for tpu_custom_call.1']
  %s0 = inlined_call_operand.vmem [shape: f32[30], index: 0, kind: input, shape index: {}]
  %s1 = inlined_call_operand.<no memory space> [shape: f32[1], index: 1, kind: input, shape index: {}]
  %s2 = inlined_call_operand.vmem [shape: f32[30], index: 2, kind: input, shape index: {}]
  %s3 = inlined_call_operand.<no memory space> [shape: f32[1], index: 3, kind: input, shape index: {}]
  %s4 = inlined_call_operand.vmem [shape: f32[25,2,256], index: 4, kind: input, shape index: {}]
  %s5 = inlined_call_operand.vmem [shape: f32[234,5], index: 5, kind: input, shape index: {}]
  %s6 = inlined_call_operand.vmem [shape: f32[1,5], index: 6, kind: input, shape index: {}]
  %s7 = inlined_call_operand.hbm [shape: f32[2,5], index: 7, kind: output, shape index: {}]
  %s8 = sld [smem:[#allocation0]]
  $region46: #{tpu_custom_call.1} parent=0
    _
  %s10 = ssub.s32 1, %s8
  %s11 = scalar_select 0, %s10, %s8
  %12 = sst [smem:[#allocation3]] %s1
  %13 = sst [smem:[#allocation4]] %s3
  $region1: #{tpu_custom_call.1} parent=0
    #allocation5 [shape = 'u8[512]{0}', space=smem, size = 0x200, scoped, tag = 'input window, operand 0, single buffered']
    #allocation6 [shape = 's32[1]{0}', space=sflag, size = 0x4, scoped, tag = 'scoped memory for tpu_custom_call.1']
    #allocation7 [shape = 's32[1]{0}', space=sflag, size = 0x4, scoped, tag = 'scoped memory for tpu_custom_call.1']
    #allocation8 [shape = 'u8[512]{0}', space=smem, size = 0x200, scoped, tag = 'input window, operand 2, single buffered']
    #allocation9 [shape = 's32[1]{0}', space=sflag, size = 0x4, scoped, tag = 'scoped memory for tpu_custom_call.1']
    #allocation10 [shape = 'u8[1024]{0}', space=vmem, size = 0x400, scoped, tag = 'output window, operand 0, single buffered']
    %14 = vsyncpa [#allocation7], 0
    %15 = vsyncpa [#allocation9], 0
    %16 = vsyncpa [#allocation6], 0
    // Predicated region
    $region2: #{tpu_custom_call.1} parent=1 // pred_check
      _
    $region3: #{tpu_custom_call.1} parent=1 // pred_check_branch
      %18 = sbr.rel (0) target = $region5
    $region4: #{tpu_custom_call.1} parent=1 // pred_region
      %20 = vsyncadd [#allocation7], 0
      %s22 = sshll.u32 %s0, 4
      %s23 = int_to_ptr.vmem [resolvable:$true] %s22
      %25 = dma.vmem_to_smem %s23, 16, [#allocation5], [#allocation7]
    $region5: #{tpu_custom_call.1} parent=1 // pred_fallthru
      _
    // Predicated region
    $region6: #{tpu_custom_call.1} parent=1 // pred_check
      _
    $region7: #{tpu_custom_call.1} parent=1 // pred_check_branch
      %27 = sbr.rel (0) target = $region9
    $region8: #{tpu_custom_call.1} parent=1 // pred_region
      _
    $region9: #{tpu_custom_call.1} parent=1 // pred_fallthru
      _
    // Predicated region
    $region10: #{tpu_custom_call.1} parent=1 // pred_check
      _
    $region11: #{tpu_custom_call.1} parent=1 // pred_check_branch
      %29 = sbr.rel (0) target = $region13
    $region12: #{tpu_custom_call.1} parent=1 // pred_region
      %31 = vsyncadd [#allocation9], 0
      %s33 = sshll.u32 %s2, 4
      %s34 = int_to_ptr.vmem [resolvable:$true] %s33
      %36 = dma.vmem_to_smem %s34, 16, [#allocation8], [#allocation9]
    $region13: #{tpu_custom_call.1} parent=1 // pred_fallthru
      _
    // Predicated region
    $region14: #{tpu_custom_call.1} parent=1 // pred_check
      _
    $region15: #{tpu_custom_call.1} parent=1 // pred_check_branch
      %38 = sbr.rel (0) target = $region17
    $region16: #{tpu_custom_call.1} parent=1 // pred_region
      _
    $region17: #{tpu_custom_call.1} parent=1 // pred_fallthru
      _
    // Predicated region
    $region18: #{tpu_custom_call.1} parent=1 // pred_check
      _
    $region19: #{tpu_custom_call.1} parent=1 // pred_check_branch
      %40 = sbr.rel (0) target = $region21
    $region20: #{tpu_custom_call.1} parent=1 // pred_region
      _
    $region21: #{tpu_custom_call.1} parent=1 // pred_fallthru
      _
    // Predicated region
    $region22: #{tpu_custom_call.1} parent=1 // pred_check
      _
    $region23: #{tpu_custom_call.1} parent=1 // pred_check_branch
      %42 = sbr.rel (0) target = $region25
    $region24: #{tpu_custom_call.1} parent=1 // pred_region
      _
    $region25: #{tpu_custom_call.1} parent=1 // pred_fallthru
      _
    // Predicated region
    $region26: #{tpu_custom_call.1} parent=1 // pred_check
      _
    $region27: #{tpu_custom_call.1} parent=1 // pred_check_branch
      %44 = sbr.rel (0) target = $region29
    $region28: #{tpu_custom_call.1} parent=1 // pred_region
      _
    $region29: #{tpu_custom_call.1} parent=1 // pred_fallthru
      _
    // Predicated region
    $region30: #{tpu_custom_call.1} parent=1 // pred_check
      _
    $region31: #{tpu_custom_call.1} parent=1 // pred_check_branch
      %46 = sbr.rel (0) target = $region33
    $region32: #{tpu_custom_call.1} parent=1 // pred_region
      %48 = dma.done [#allocation7], 16
    $region33: #{tpu_custom_call.1} parent=1 // pred_fallthru
      _
    // Predicated region
    $region34: #{tpu_custom_call.1} parent=1 // pred_check
      _
    $region35: #{tpu_custom_call.1} parent=1 // pred_check_branch
      %50 = sbr.rel (0) target = $region37
    $region36: #{tpu_custom_call.1} parent=1 // pred_region
      %52 = dma.done [#allocation9], 16
    $region37: #{tpu_custom_call.1} parent=1 // pred_fallthru
      _
    %53 = sfence
    %s54 = sld [smem:[#allocation3]]
    %v55 = vstv %s54
    %s56 = sld [smem:[#allocation5]]
    %v57 = vstv %s56
    %v58 = vld [vmem:[%s4] sm:$0xf]
    %v59 = vmul.f32 %v57, %v58
    %v60 = vadd.f32 %v55, %v59
    %s61 = scalar_lea.vmem %s4, 20
    %v62 = vld [vmem:[%s61] sm:$0xf]
    %v63 = vmul.f32 %v57, %v62
    %v64 = vadd.f32 %v55, %v63
    %s65 = scalar_lea.vmem %s4, 40
    %v66 = vld [vmem:[%s65] sm:$0xf]
    %v67 = vmul.f32 %v57, %v66
    %v68 = vadd.f32 %v55, %v67
    %s69 = scalar_lea.vmem %s4, 60
    %v70 = vld [vmem:[%s69] sm:$0xf]
    %v71 = vmul.f32 %v57, %v70
    %v72 = vadd.f32 %v55, %v71
    %s73 = scalar_lea.vmem %s4, 80
    %v74 = vld [vmem:[%s73] sm:$0xf]
    %v75 = vmul.f32 %v57, %v74
    %v76 = vadd.f32 %v55, %v75
    %s77 = sld [smem:[#allocation5 + $0x1]]
    %v78 = vstv %s77
    %s79 = scalar_lea.vmem %s4, 4
    %v80 = vld [vmem:[%s79] sm:$0xf]
    %v81 = vmul.f32 %v78, %v80
    %v82 = vadd.f32 %v60, %v81
    %s83 = scalar_lea.vmem %s4, 24
    %v84 = vld [vmem:[%s83] sm:$0xf]
    %v85 = vmul.f32 %v78, %v84
    %v86 = vadd.f32 %v64, %v85
    %s87 = scalar_lea.vmem %s4, 44
    %v88 = vld [vmem:[%s87] sm:$0xf]
    %v89 = vmul.f32 %v78, %v88
    %v90 = vadd.f32 %v68, %v89
    %s91 = scalar_lea.vmem %s4, 64
    %v92 = vld [vmem:[%s91] sm:$0xf]
    %v93 = vmul.f32 %v78, %v92
    %v94 = vadd.f32 %v72, %v93
    %s95 = scalar_lea.vmem %s4, 84
    %v96 = vld [vmem:[%s95] sm:$0xf]
    %v97 = vmul.f32 %v78, %v96
    %v98 = vadd.f32 %v76, %v97
    %s99 = sld [smem:[#allocation5 + $0x2]]
    %v100 = vstv %s99
    %s101 = scalar_lea.vmem %s4, 8
    %v102 = vld [vmem:[%s101] sm:$0xf]
    %v103 = vmul.f32 %v100, %v102
    %v104 = vadd.f32 %v82, %v103
    %s105 = scalar_lea.vmem %s4, 28
    %v106 = vld [vmem:[%s105] sm:$0xf]
    %v107 = vmul.f32 %v100, %v106
    %v108 = vadd.f32 %v86, %v107
    %s109 = scalar_lea.vmem %s4, 48
    %v110 = vld [vmem:[%s109] sm:$0xf]
    %v111 = vmul.f32 %v100, %v110
    %v112 = vadd.f32 %v90, %v111
    %s113 = scalar_lea.vmem %s4, 68
    %v114 = vld [vmem:[%s113] sm:$0xf]
    %v115 = vmul.f32 %v100, %v114
    %v116 = vadd.f32 %v94, %v115
    %s117 = scalar_lea.vmem %s4, 88
    %v118 = vld [vmem:[%s117] sm:$0xf]
    %v119 = vmul.f32 %v100, %v118
    %v120 = vadd.f32 %v98, %v119
    %s121 = sld [smem:[#allocation5 + $0x3]]
    %v122 = vstv %s121
    %s123 = scalar_lea.vmem %s4, 12
    %v124 = vld [vmem:[%s123] sm:$0xf]
    %v125 = vmul.f32 %v122, %v124
    %v126 = vadd.f32 %v104, %v125
    %s127 = scalar_lea.vmem %s4, 32
    %v128 = vld [vmem:[%s127] sm:$0xf]
    %v129 = vmul.f32 %v122, %v128
    %v130 = vadd.f32 %v108, %v129
    %s131 = scalar_lea.vmem %s4, 52
    %v132 = vld [vmem:[%s131] sm:$0xf]
    %v133 = vmul.f32 %v122, %v132
    %v134 = vadd.f32 %v112, %v133
    %s135 = scalar_lea.vmem %s4, 72
    %v136 = vld [vmem:[%s135] sm:$0xf]
    %v137 = vmul.f32 %v122, %v136
    %v138 = vadd.f32 %v116, %v137
    %s139 = scalar_lea.vmem %s4, 92
    %v140 = vld [vmem:[%s139] sm:$0xf]
    %v141 = vmul.f32 %v122, %v140
    %v142 = vadd.f32 %v120, %v141
    %s143 = sld [smem:[#allocation5 + $0x4]]
    %v144 = vstv %s143
    %s145 = scalar_lea.vmem %s4, 16
    %v146 = vld [vmem:[%s145] sm:$0xf]
    %v147 = vmul.f32 %v144, %v146
    %v148 = vadd.f32 %v126, %v147
    %s149 = scalar_lea.vmem %s4, 36
    %v150 = vld [vmem:[%s149] sm:$0xf]
    %v151 = vmul.f32 %v144, %v150
    %v152 = vadd.f32 %v130, %v151
    %s153 = scalar_lea.vmem %s4, 56
    %v154 = vld [vmem:[%s153] sm:$0xf]
    %v155 = vmul.f32 %v144, %v154
    %v156 = vadd.f32 %v134, %v155
    %s157 = scalar_lea.vmem %s4, 76
    %v158 = vld [vmem:[%s157] sm:$0xf]
    %v159 = vmul.f32 %v144, %v158
    %v160 = vadd.f32 %v138, %v159
    %s161 = scalar_lea.vmem %s4, 96
    %v162 = vld [vmem:[%s161] sm:$0xf]
    %v163 = vmul.f32 %v144, %v162
    %v164 = vadd.f32 %v142, %v163
    %s165 = sld [smem:[#allocation5 + $0x5]]
    %v166 = vstv %s165
    %v167 = vmul.f32 %v166, %v62
    %v168 = vadd.f32 %v148, %v167
    %v169 = vmul.f32 %v166, %v66
    %v170 = vadd.f32 %v152, %v169
    %v171 = vmul.f32 %v166, %v70
    %v172 = vadd.f32 %v156, %v171
    %v173 = vmul.f32 %v166, %v74
    %v174 = vadd.f32 %v160, %v173
    %v175 = vmul.f32 %v166, %v58
    %177 = vrot.lane.b32.xlu0 %v175, 127
    %v178 = vpop.permute.xlu0 %177
    %v179 = vrot.slane %v178, 2
    %vm180 = vcmask 1039360
    %v181 = vsel %vm180, %v178, %v179
    %v183 = vadd.f32 %v164, %v181
    %s184 = sld [smem:[#allocation5 + $0x6]]
    %v185 = vstv %s184
    %v186 = vmul.f32 %v185, %v84
    %v187 = vadd.f32 %v168, %v186
    %v188 = vmul.f32 %v185, %v88
    %v189 = vadd.f32 %v170, %v188
    %v190 = vmul.f32 %v185, %v92
    %v191 = vadd.f32 %v172, %v190
    %v192 = vmul.f32 %v185, %v96
    %v193 = vadd.f32 %v174, %v192
    %v194 = vmul.f32 %v185, %v80
    %196 = vrot.lane.b32.xlu0 %v194, 127
    %v197 = vpop.permute.xlu0 %196
    %v198 = vrot.slane %v197, 2
    %v199 = vsel %vm180, %v197, %v198
    %v201 = vadd.f32 %v183, %v199
    %s202 = sld [smem:[#allocation5 + $0x7]]
    %v203 = vstv %s202
    %v204 = vmul.f32 %v203, %v106
    %v205 = vadd.f32 %v187, %v204
    %v206 = vmul.f32 %v203, %v110
    %v207 = vadd.f32 %v189, %v206
    %v208 = vmul.f32 %v203, %v114
    %v209 = vadd.f32 %v191, %v208
    %v210 = vmul.f32 %v203, %v118
    %v211 = vadd.f32 %v193, %v210
    %v212 = vmul.f32 %v203, %v102
    %214 = vrot.lane.b32.xlu0 %v212, 127
    %v215 = vpop.permute.xlu0 %214
    %v216 = vrot.slane %v215, 2
    %v217 = vsel %vm180, %v215, %v216
    %v219 = vadd.f32 %v201, %v217
    %s220 = sld [smem:[#allocation5 + $0x8]]
    %v221 = vstv %s220
    %v222 = vmul.f32 %v221, %v128
    %v223 = vadd.f32 %v205, %v222
    %v224 = vmul.f32 %v221, %v132
    %v225 = vadd.f32 %v207, %v224
    %v226 = vmul.f32 %v221, %v136
    %v227 = vadd.f32 %v209, %v226
    %v228 = vmul.f32 %v221, %v140
    %v229 = vadd.f32 %v211, %v228
    %v230 = vmul.f32 %v221, %v124
    %232 = vrot.lane.b32.xlu0 %v230, 127
    %v233 = vpop.permute.xlu0 %232
    %v234 = vrot.slane %v233, 2
    %v235 = vsel %vm180, %v233, %v234
    %v237 = vadd.f32 %v219, %v235
    %s238 = sld [smem:[#allocation5 + $0x9]]
    %v239 = vstv %s238
    %v240 = vmul.f32 %v239, %v150
    %v241 = vadd.f32 %v223, %v240
    %v242 = vmul.f32 %v239, %v154
    %v243 = vadd.f32 %v225, %v242
    %v244 = vmul.f32 %v239, %v158
    %v245 = vadd.f32 %v227, %v244
    %v246 = vmul.f32 %v239, %v162
    %v247 = vadd.f32 %v229, %v246
    %v248 = vmul.f32 %v239, %v146
    %250 = vrot.lane.b32.xlu0 %v248, 127
    %v251 = vpop.permute.xlu0 %250
    %v252 = vrot.slane %v251, 2
    %v253 = vsel %vm180, %v251, %v252
    %v255 = vadd.f32 %v237, %v253
    %s256 = sld [smem:[#allocation5 + $0xa]]
    %v257 = vstv %s256
    %v258 = vmul.f32 %v257, %v66
    %v259 = vadd.f32 %v241, %v258
    %v260 = vmul.f32 %v257, %v70
    %v261 = vadd.f32 %v243, %v260
    %v262 = vmul.f32 %v257, %v74
    %v263 = vadd.f32 %v245, %v262
    %v264 = vmul.f32 %v257, %v58
    %266 = vrot.lane.b32.xlu0 %v264, 127
    %v267 = vpop.permute.xlu0 %266
    %v268 = vrot.slane %v267, 2
    %v269 = vsel %vm180, %v267, %v268
    %v271 = vadd.f32 %v247, %v269
    %v272 = vmul.f32 %v257, %v62
    %274 = vrot.lane.b32.xlu0 %v272, 127
    %v275 = vpop.permute.xlu0 %274
    %v276 = vrot.slane %v275, 2
    %v277 = vsel %vm180, %v275, %v276
    %v279 = vadd.f32 %v255, %v277
    %s280 = sld [smem:[#allocation5 + $0xb]]
    %v281 = vstv %s280
    %v282 = vmul.f32 %v281, %v88
    %v283 = vadd.f32 %v259, %v282
    %v284 = vmul.f32 %v281, %v92
    %v285 = vadd.f32 %v261, %v284
    %v286 = vmul.f32 %v281, %v96
    %v287 = vadd.f32 %v263, %v286
    %v288 = vmul.f32 %v281, %v80
    %290 = vrot.lane.b32.xlu0 %v288, 127
    %v291 = vpop.permute.xlu0 %290
    %v292 = vrot.slane %v291, 2
    %v293 = vsel %vm180, %v291, %v292
    %v295 = vadd.f32 %v271, %v293
    %v296 = vmul.f32 %v281, %v84
    %298 = vrot.lane.b32.xlu0 %v296, 127
    %v299 = vpop.permute.xlu0 %298
    %v300 = vrot.slane %v299, 2
    %v301 = vsel %vm180, %v299, %v300
    %v303 = vadd.f32 %v279, %v301
    %s304 = sld [smem:[#allocation5 + $0xc]]
    %v305 = vstv %s304
    %v306 = vmul.f32 %v305, %v110
    %v307 = vadd.f32 %v283, %v306
    %v308 = vmul.f32 %v305, %v114
    %v309 = vadd.f32 %v285, %v308
    %v310 = vmul.f32 %v305, %v118
    %v311 = vadd.f32 %v287, %v310
    %v312 = vmul.f32 %v305, %v102
    %314 = vrot.lane.b32.xlu0 %v312, 127
    %v315 = vpop.permute.xlu0 %314
    %v316 = vrot.slane %v315, 2
    %v317 = vsel %vm180, %v315, %v316
    %v319 = vadd.f32 %v295, %v317
    %v320 = vmul.f32 %v305, %v106
    %322 = vrot.lane.b32.xlu0 %v320, 127
    %v323 = vpop.permute.xlu0 %322
    %v324 = vrot.slane %v323, 2
    %v325 = vsel %vm180, %v323, %v324
    %v327 = vadd.f32 %v303, %v325
    %s328 = sld [smem:[#allocation5 + $0xd]]
    %v329 = vstv %s328
    %v330 = vmul.f32 %v329, %v132
    %v331 = vadd.f32 %v307, %v330
    %v332 = vmul.f32 %v329, %v136
    %v333 = vadd.f32 %v309, %v332
    %v334 = vmul.f32 %v329, %v140
    %v335 = vadd.f32 %v311, %v334
    %v336 = vmul.f32 %v329, %v124
    %338 = vrot.lane.b32.xlu0 %v336, 127
    %v339 = vpop.permute.xlu0 %338
    %v340 = vrot.slane %v339, 2
    %v341 = vsel %vm180, %v339, %v340
    %v343 = vadd.f32 %v319, %v341
    %v344 = vmul.f32 %v329, %v128
    %346 = vrot.lane.b32.xlu0 %v344, 127
    %v347 = vpop.permute.xlu0 %346
    %v348 = vrot.slane %v347, 2
    %v349 = vsel %vm180, %v347, %v348
    %v351 = vadd.f32 %v327, %v349
    %s352 = sld [smem:[#allocation5 + $0xe]]
    %v353 = vstv %s352
    %v354 = vmul.f32 %v353, %v154
    %v355 = vadd.f32 %v331, %v354
    %v356 = vmul.f32 %v353, %v158
    %v357 = vadd.f32 %v333, %v356
    %v358 = vmul.f32 %v353, %v162
    %v359 = vadd.f32 %v335, %v358
    %v360 = vmul.f32 %v353, %v146
    %362 = vrot.lane.b32.xlu0 %v360, 127
    %v363 = vpop.permute.xlu0 %362
    %v364 = vrot.slane %v363, 2
    %v365 = vsel %vm180, %v363, %v364
    %v367 = vadd.f32 %v343, %v365
    %v368 = vmul.f32 %v353, %v150
    %370 = vrot.lane.b32.xlu0 %v368, 127
    %v371 = vpop.permute.xlu0 %370
    %v372 = vrot.slane %v371, 2
    %v373 = vsel %vm180, %v371, %v372
    %v375 = vadd.f32 %v351, %v373
    %s376 = sld [smem:[#allocation5 + $0xf]]
    %v377 = vstv %s376
    %v378 = vmul.f32 %v377, %v70
    %v379 = vadd.f32 %v355, %v378
    %v380 = vmul.f32 %v377, %v74
    %v381 = vadd.f32 %v357, %v380
    %v382 = vmul.f32 %v377, %v58
    %384 = vrot.lane.b32.xlu0 %v382, 127
    %v385 = vpop.permute.xlu0 %384
    %v386 = vrot.slane %v385, 2
    %v387 = vsel %vm180, %v385, %v386
    %v389 = vadd.f32 %v359, %v387
    %v390 = vmul.f32 %v377, %v62
    %392 = vrot.lane.b32.xlu0 %v390, 127
    %v393 = vpop.permute.xlu0 %392
    %v394 = vrot.slane %v393, 2
    %v395 = vsel %vm180, %v393, %v394
    %v397 = vadd.f32 %v367, %v395
    %v398 = vmul.f32 %v377, %v66
    %400 = vrot.lane.b32.xlu0 %v398, 127
    %v401 = vpop.permute.xlu0 %400
    %v402 = vrot.slane %v401, 2
    %v403 = vsel %vm180, %v401, %v402
    %v405 = vadd.f32 %v375, %v403
    %s406 = sld [smem:[#allocation5 + $0x10]]
    %v407 = vstv %s406
    %v408 = vmul.f32 %v407, %v92
    %v409 = vadd.f32 %v379, %v408
    %v410 = vmul.f32 %v407, %v96
    %v411 = vadd.f32 %v381, %v410
    %v412 = vmul.f32 %v407, %v80
    %414 = vrot.lane.b32.xlu0 %v412, 127
    %v415 = vpop.permute.xlu0 %414
    %v416 = vrot.slane %v415, 2
    %v417 = vsel %vm180, %v415, %v416
    %v419 = vadd.f32 %v389, %v417
    %v420 = vmul.f32 %v407, %v84
    %422 = vrot.lane.b32.xlu0 %v420, 127
    %v423 = vpop.permute.xlu0 %422
    %v424 = vrot.slane %v423, 2
    %v425 = vsel %vm180, %v423, %v424
    %v427 = vadd.f32 %v397, %v425
    %v428 = vmul.f32 %v407, %v88
    %430 = vrot.lane.b32.xlu0 %v428, 127
    %v431 = vpop.permute.xlu0 %430
    %v432 = vrot.slane %v431, 2
    %v433 = vsel %vm180, %v431, %v432
    %v435 = vadd.f32 %v405, %v433
    %s436 = sld [smem:[#allocation5 + $0x11]]
    %v437 = vstv %s436
    %v438 = vmul.f32 %v437, %v114
    %v439 = vadd.f32 %v409, %v438
    %v440 = vmul.f32 %v437, %v118
    %v441 = vadd.f32 %v411, %v440
    %v442 = vmul.f32 %v437, %v102
    %444 = vrot.lane.b32.xlu0 %v442, 127
    %v445 = vpop.permute.xlu0 %444
    %v446 = vrot.slane %v445, 2
    %v447 = vsel %vm180, %v445, %v446
    %v449 = vadd.f32 %v419, %v447
    %v450 = vmul.f32 %v437, %v106
    %452 = vrot.lane.b32.xlu0 %v450, 127
    %v453 = vpop.permute.xlu0 %452
    %v454 = vrot.slane %v453, 2
    %v455 = vsel %vm180, %v453, %v454
    %v457 = vadd.f32 %v427, %v455
    %v458 = vmul.f32 %v437, %v110
    %460 = vrot.lane.b32.xlu0 %v458, 127
    %v461 = vpop.permute.xlu0 %460
    %v462 = vrot.slane %v461, 2
    %v463 = vsel %vm180, %v461, %v462
    %v465 = vadd.f32 %v435, %v463
    %s466 = sld [smem:[#allocation5 + $0x12]]
    %v467 = vstv %s466
    %v468 = vmul.f32 %v467, %v136
    %v469 = vadd.f32 %v439, %v468
    %v470 = vmul.f32 %v467, %v140
    %v471 = vadd.f32 %v441, %v470
    %v472 = vmul.f32 %v467, %v124
    %474 = vrot.lane.b32.xlu0 %v472, 127
    %v475 = vpop.permute.xlu0 %474
    %v476 = vrot.slane %v475, 2
    %v477 = vsel %vm180, %v475, %v476
    %v479 = vadd.f32 %v449, %v477
    %v480 = vmul.f32 %v467, %v128
    %482 = vrot.lane.b32.xlu0 %v480, 127
    %v483 = vpop.permute.xlu0 %482
    %v484 = vrot.slane %v483, 2
    %v485 = vsel %vm180, %v483, %v484
    %v487 = vadd.f32 %v457, %v485
    %v488 = vmul.f32 %v467, %v132
    %490 = vrot.lane.b32.xlu0 %v488, 127
    %v491 = vpop.permute.xlu0 %490
    %v492 = vrot.slane %v491, 2
    %v493 = vsel %vm180, %v491, %v492
    %v495 = vadd.f32 %v465, %v493
    %s496 = sld [smem:[#allocation5 + $0x13]]
    %v497 = vstv %s496
    %v498 = vmul.f32 %v497, %v158
    %v499 = vadd.f32 %v469, %v498
    %v500 = vmul.f32 %v497, %v162
    %v501 = vadd.f32 %v471, %v500
    %v502 = vmul.f32 %v497, %v146
    %504 = vrot.lane.b32.xlu0 %v502, 127
    %v505 = vpop.permute.xlu0 %504
    %v506 = vrot.slane %v505, 2
    %v507 = vsel %vm180, %v505, %v506
    %v509 = vadd.f32 %v479, %v507
    %v510 = vmul.f32 %v497, %v150
    %512 = vrot.lane.b32.xlu0 %v510, 127
    %v513 = vpop.permute.xlu0 %512
    %v514 = vrot.slane %v513, 2
    %v515 = vsel %vm180, %v513, %v514
    %v517 = vadd.f32 %v487, %v515
    %v518 = vmul.f32 %v497, %v154
    %520 = vrot.lane.b32.xlu0 %v518, 127
    %v521 = vpop.permute.xlu0 %520
    %v522 = vrot.slane %v521, 2
    %v523 = vsel %vm180, %v521, %v522
    %v525 = vadd.f32 %v495, %v523
    %s526 = sld [smem:[#allocation5 + $0x14]]
    %v527 = vstv %s526
    %v528 = vmul.f32 %v527, %v74
    %v529 = vadd.f32 %v499, %v528
    %v530 = vmul.f32 %v527, %v58
    %532 = vrot.lane.b32.xlu0 %v530, 127
    %v533 = vpop.permute.xlu0 %532
    %v534 = vrot.slane %v533, 2
    %v535 = vsel %vm180, %v533, %v534
    %v537 = vadd.f32 %v501, %v535
    %v538 = vmul.f32 %v527, %v62
    %540 = vrot.lane.b32.xlu0 %v538, 127
    %v541 = vpop.permute.xlu0 %540
    %v542 = vrot.slane %v541, 2
    %v543 = vsel %vm180, %v541, %v542
    %v545 = vadd.f32 %v509, %v543
    %v546 = vmul.f32 %v527, %v66
    %548 = vrot.lane.b32.xlu0 %v546, 127
    %v549 = vpop.permute.xlu0 %548
    %v550 = vrot.slane %v549, 2
    %v551 = vsel %vm180, %v549, %v550
    %v553 = vadd.f32 %v517, %v551
    %v554 = vmul.f32 %v527, %v70
    %556 = vrot.lane.b32.xlu0 %v554, 127
    %v557 = vpop.permute.xlu0 %556
    %v558 = vrot.slane %v557, 2
    %v559 = vsel %vm180, %v557, %v558
    %v561 = vadd.f32 %v525, %v559
    %s562 = sld [smem:[#allocation5 + $0x15]]
    %v563 = vstv %s562
    %v564 = vmul.f32 %v563, %v96
    %v565 = vadd.f32 %v529, %v564
    %v566 = vmul.f32 %v563, %v80
    %568 = vrot.lane.b32.xlu0 %v566, 127
    %v569 = vpop.permute.xlu0 %568
    %v570 = vrot.slane %v569, 2
    %v571 = vsel %vm180, %v569, %v570
    %v573 = vadd.f32 %v537, %v571
    %v574 = vmul.f32 %v563, %v84
    %576 = vrot.lane.b32.xlu0 %v574, 127
    %v577 = vpop.permute.xlu0 %576
    %v578 = vrot.slane %v577, 2
    %v579 = vsel %vm180, %v577, %v578
    %v581 = vadd.f32 %v545, %v579
    %v582 = vmul.f32 %v563, %v88
    %584 = vrot.lane.b32.xlu0 %v582, 127
    %v585 = vpop.permute.xlu0 %584
    %v586 = vrot.slane %v585, 2
    %v587 = vsel %vm180, %v585, %v586
    %v589 = vadd.f32 %v553, %v587
    %v590 = vmul.f32 %v563, %v92
    %592 = vrot.lane.b32.xlu0 %v590, 127
    %v593 = vpop.permute.xlu0 %592
    %v594 = vrot.slane %v593, 2
    %v595 = vsel %vm180, %v593, %v594
    %v597 = vadd.f32 %v561, %v595
    %s598 = sld [smem:[#allocation5 + $0x16]]
    %v599 = vstv %s598
    %v600 = vmul.f32 %v599, %v118
    %v601 = vadd.f32 %v565, %v600
    %v602 = vmul.f32 %v599, %v102
    %604 = vrot.lane.b32.xlu0 %v602, 127
    %v605 = vpop.permute.xlu0 %604
    %v606 = vrot.slane %v605, 2
    %v607 = vsel %vm180, %v605, %v606
    %v609 = vadd.f32 %v573, %v607
    %v610 = vmul.f32 %v599, %v106
    %612 = vrot.lane.b32.xlu0 %v610, 127
    %v613 = vpop.permute.xlu0 %612
    %v614 = vrot.slane %v613, 2
    %v615 = vsel %vm180, %v613, %v614
    %v617 = vadd.f32 %v581, %v615
    %v618 = vmul.f32 %v599, %v110
    %620 = vrot.lane.b32.xlu0 %v618, 127
    %v621 = vpop.permute.xlu0 %620
    %v622 = vrot.slane %v621, 2
    %v623 = vsel %vm180, %v621, %v622
    %v625 = vadd.f32 %v589, %v623
    %v626 = vmul.f32 %v599, %v114
    %628 = vrot.lane.b32.xlu0 %v626, 127
    %v629 = vpop.permute.xlu0 %628
    %v630 = vrot.slane %v629, 2
    %v631 = vsel %vm180, %v629, %v630
    %v633 = vadd.f32 %v597, %v631
    %s634 = sld [smem:[#allocation5 + $0x17]]
    %v635 = vstv %s634
    %v636 = vmul.f32 %v635, %v140
    %v637 = vadd.f32 %v601, %v636
    %v638 = vmul.f32 %v635, %v124
    %640 = vrot.lane.b32.xlu0 %v638, 127
    %v641 = vpop.permute.xlu0 %640
    %v642 = vrot.slane %v641, 2
    %v643 = vsel %vm180, %v641, %v642
    %v645 = vadd.f32 %v609, %v643
    %v646 = vmul.f32 %v635, %v128
    %648 = vrot.lane.b32.xlu0 %v646, 127
    %v649 = vpop.permute.xlu0 %648
    %v650 = vrot.slane %v649, 2
    %v651 = vsel %vm180, %v649, %v650
    %v653 = vadd.f32 %v617, %v651
    %v654 = vmul.f32 %v635, %v132
    %656 = vrot.lane.b32.xlu0 %v654, 127
    %v657 = vpop.permute.xlu0 %656
    %v658 = vrot.slane %v657, 2
    %v659 = vsel %vm180, %v657, %v658
    %v661 = vadd.f32 %v625, %v659
    %v662 = vmul.f32 %v635, %v136
    %664 = vrot.lane.b32.xlu0 %v662, 127
    %v665 = vpop.permute.xlu0 %664
    %v666 = vrot.slane %v665, 2
    %v667 = vsel %vm180, %v665, %v666
    %v669 = vadd.f32 %v633, %v667
    %s670 = sld [smem:[#allocation5 + $0x18]]
    %v671 = vstv %s670
    %v672 = vmul.f32 %v671, %v162
    %v673 = vadd.f32 %v637, %v672
    %v674 = vmul.f32 %v671, %v146
    %676 = vrot.lane.b32.xlu0 %v674, 127
    %v677 = vpop.permute.xlu0 %676
    %v678 = vrot.slane %v677, 2
    %v679 = vsel %vm180, %v677, %v678
    %v681 = vadd.f32 %v645, %v679
    %v682 = vmul.f32 %v671, %v150
    %684 = vrot.lane.b32.xlu0 %v682, 127
    %v685 = vpop.permute.xlu0 %684
    %v686 = vrot.slane %v685, 2
    %v687 = vsel %vm180, %v685, %v686
    %v689 = vadd.f32 %v653, %v687
    %v690 = vmul.f32 %v671, %v154
    %692 = vrot.lane.b32.xlu0 %v690, 127
    %v693 = vpop.permute.xlu0 %692
    %v694 = vrot.slane %v693, 2
    %v695 = vsel %vm180, %v693, %v694
    %v697 = vadd.f32 %v661, %v695
    %v698 = vmul.f32 %v671, %v158
    %700 = vrot.lane.b32.xlu0 %v698, 127
    %v701 = vpop.permute.xlu0 %700
    %v702 = vrot.slane %v701, 2
    %v703 = vsel %vm180, %v701, %v702
    %v705 = vadd.f32 %v669, %v703
    %s706 = sld [smem:[#allocation5 + $0x19]]
    %v707 = vstv %s706
    %v708 = vmul.f32 %v707, %v58
    %710 = vrot.lane.b32.xlu0 %v708, 127
    %v711 = vpop.permute.xlu0 %710
    %v712 = vrot.slane %v711, 2
    %v713 = vsel %vm180, %v711, %v712
    %v715 = vadd.f32 %v673, %v713
    %v716 = vmul.f32 %v707, %v62
    %718 = vrot.lane.b32.xlu0 %v716, 127
    %v719 = vpop.permute.xlu0 %718
    %v720 = vrot.slane %v719, 2
    %v721 = vsel %vm180, %v719, %v720
    %v723 = vadd.f32 %v681, %v721
    %v724 = vmul.f32 %v707, %v66
    %726 = vrot.lane.b32.xlu0 %v724, 127
    %v727 = vpop.permute.xlu0 %726
    %v728 = vrot.slane %v727, 2
    %v729 = vsel %vm180, %v727, %v728
    %v731 = vadd.f32 %v689, %v729
    %v732 = vmul.f32 %v707, %v70
    %734 = vrot.lane.b32.xlu0 %v732, 127
    %v735 = vpop.permute.xlu0 %734
    %v736 = vrot.slane %v735, 2
    %v737 = vsel %vm180, %v735, %v736
    %v739 = vadd.f32 %v697, %v737
    %v740 = vmul.f32 %v707, %v74
    %742 = vrot.lane.b32.xlu0 %v740, 127
    %v743 = vpop.permute.xlu0 %742
    %v744 = vrot.slane %v743, 2
    %v745 = vsel %vm180, %v743, %v744
    %v747 = vadd.f32 %v705, %v745
    %s748 = sld [smem:[#allocation5 + $0x1a]]
    %v749 = vstv %s748
    %v750 = vmul.f32 %v749, %v80
    %752 = vrot.lane.b32.xlu0 %v750, 127
    %v753 = vpop.permute.xlu0 %752
    %v754 = vrot.slane %v753, 2
    %v755 = vsel %vm180, %v753, %v754
    %v757 = vadd.f32 %v715, %v755
    %v758 = vmul.f32 %v749, %v84
    %760 = vrot.lane.b32.xlu0 %v758, 127
    %v761 = vpop.permute.xlu0 %760
    %v762 = vrot.slane %v761, 2
    %v763 = vsel %vm180, %v761, %v762
    %v765 = vadd.f32 %v723, %v763
    %v766 = vmul.f32 %v749, %v88
    %768 = vrot.lane.b32.xlu0 %v766, 127
    %v769 = vpop.permute.xlu0 %768
    %v770 = vrot.slane %v769, 2
    %v771 = vsel %vm180, %v769, %v770
    %v773 = vadd.f32 %v731, %v771
    %v774 = vmul.f32 %v749, %v92
    %776 = vrot.lane.b32.xlu0 %v774, 127
    %v777 = vpop.permute.xlu0 %776
    %v778 = vrot.slane %v777, 2
    %v779 = vsel %vm180, %v777, %v778
    %v781 = vadd.f32 %v739, %v779
    %v782 = vmul.f32 %v749, %v96
    %784 = vrot.lane.b32.xlu0 %v782, 127
    %v785 = vpop.permute.xlu0 %784
    %v786 = vrot.slane %v785, 2
    %v787 = vsel %vm180, %v785, %v786
    %v789 = vadd.f32 %v747, %v787
    %s790 = sld [smem:[#allocation5 + $0x1b]]
    %v791 = vstv %s790
    %v792 = vmul.f32 %v791, %v102
    %794 = vrot.lane.b32.xlu0 %v792, 127
    %v795 = vpop.permute.xlu0 %794
    %v796 = vrot.slane %v795, 2
    %v797 = vsel %vm180, %v795, %v796
    %v799 = vadd.f32 %v757, %v797
    %v800 = vmul.f32 %v791, %v106
    %802 = vrot.lane.b32.xlu0 %v800, 127
    %v803 = vpop.permute.xlu0 %802
    %v804 = vrot.slane %v803, 2
    %v805 = vsel %vm180, %v803, %v804
    %v807 = vadd.f32 %v765, %v805
    %v808 = vmul.f32 %v791, %v110
    %810 = vrot.lane.b32.xlu0 %v808, 127
    %v811 = vpop.permute.xlu0 %810
    %v812 = vrot.slane %v811, 2
    %v813 = vsel %vm180, %v811, %v812
    %v815 = vadd.f32 %v773, %v813
    %v816 = vmul.f32 %v791, %v114
    %818 = vrot.lane.b32.xlu0 %v816, 127
    %v819 = vpop.permute.xlu0 %818
    %v820 = vrot.slane %v819, 2
    %v821 = vsel %vm180, %v819, %v820
    %v823 = vadd.f32 %v781, %v821
    %v824 = vmul.f32 %v791, %v118
    %826 = vrot.lane.b32.xlu0 %v824, 127
    %v827 = vpop.permute.xlu0 %826
    %v828 = vrot.slane %v827, 2
    %v829 = vsel %vm180, %v827, %v828
    %v831 = vadd.f32 %v789, %v829
    %s832 = sld [smem:[#allocation5 + $0x1c]]
    %v833 = vstv %s832
    %v834 = vmul.f32 %v833, %v124
    %836 = vrot.lane.b32.xlu0 %v834, 127
    %v837 = vpop.permute.xlu0 %836
    %v838 = vrot.slane %v837, 2
    %v839 = vsel %vm180, %v837, %v838
    %v841 = vadd.f32 %v799, %v839
    %v842 = vmul.f32 %v833, %v128
    %844 = vrot.lane.b32.xlu0 %v842, 127
    %v845 = vpop.permute.xlu0 %844
    %v846 = vrot.slane %v845, 2
    %v847 = vsel %vm180, %v845, %v846
    %v849 = vadd.f32 %v807, %v847
    %v850 = vmul.f32 %v833, %v132
    %852 = vrot.lane.b32.xlu0 %v850, 127
    %v853 = vpop.permute.xlu0 %852
    %v854 = vrot.slane %v853, 2
    %v855 = vsel %vm180, %v853, %v854
    %v857 = vadd.f32 %v815, %v855
    %v858 = vmul.f32 %v833, %v136
    %860 = vrot.lane.b32.xlu0 %v858, 127
    %v861 = vpop.permute.xlu0 %860
    %v862 = vrot.slane %v861, 2
    %v863 = vsel %vm180, %v861, %v862
    %v865 = vadd.f32 %v823, %v863
    %v866 = vmul.f32 %v833, %v140
    %868 = vrot.lane.b32.xlu0 %v866, 127
    %v869 = vpop.permute.xlu0 %868
    %v870 = vrot.slane %v869, 2
    %v871 = vsel %vm180, %v869, %v870
    %v873 = vadd.f32 %v831, %v871
    %s874 = sld [smem:[#allocation5 + $0x1d]]
    %v875 = vstv %s874
    %v876 = vmul.f32 %v875, %v146
    %878 = vrot.lane.b32.xlu0 %v876, 127
    %v879 = vpop.permute.xlu0 %878
    %v880 = vrot.slane %v879, 2
    %v881 = vsel %vm180, %v879, %v880
    %v883 = vadd.f32 %v841, %v881
    %v884 = vmul.f32 %v875, %v150
    %886 = vrot.lane.b32.xlu0 %v884, 127
    %v887 = vpop.permute.xlu0 %886
    %v888 = vrot.slane %v887, 2
    %v889 = vsel %vm180, %v887, %v888
    %v891 = vadd.f32 %v849, %v889
    %v892 = vmul.f32 %v875, %v154
    %894 = vrot.lane.b32.xlu0 %v892, 127
    %v895 = vpop.permute.xlu0 %894
    %v896 = vrot.slane %v895, 2
    %v897 = vsel %vm180, %v895, %v896
    %v899 = vadd.f32 %v857, %v897
    %v900 = vmul.f32 %v875, %v158
    %902 = vrot.lane.b32.xlu0 %v900, 127
    %v903 = vpop.permute.xlu0 %902
    %v904 = vrot.slane %v903, 2
    %v905 = vsel %vm180, %v903, %v904
    %v907 = vadd.f32 %v865, %v905
    %v908 = vmul.f32 %v875, %v162
    %910 = vrot.lane.b32.xlu0 %v908, 127
    %v911 = vpop.permute.xlu0 %910
    %v912 = vrot.slane %v911, 2
    %v913 = vsel %vm180, %v911, %v912
    %v915 = vadd.f32 %v873, %v913
    %v916 = vmax.f32 %v883, 0.0
    %vm917 = vcmask 1041408
    %vm918 = vcmask 912386
    %vm919 = vmor %vm918, %vm917
    %920 = vst.msk [vmem:[#allocation2] sm:$0xf] %vm919, %v916
    %v921 = vmax.f32 %v891, 0.0
    %s922 = scalar_lea.vmem [#allocation2], 4
    %923 = vst.msk [vmem:[%s922] sm:$0xf] %vm919, %v921
    %v924 = vmax.f32 %v899, 0.0
    %s925 = scalar_lea.vmem [#allocation2], 8
    %926 = vst.msk [vmem:[%s925] sm:$0xf] %vm919, %v924
    %v927 = vmax.f32 %v907, 0.0
    %s928 = scalar_lea.vmem [#allocation2], 12
    %929 = vst.msk [vmem:[%s928] sm:$0xf] %vm919, %v927
    %v930 = vmax.f32 %v915, 0.0
    %s931 = scalar_lea.vmem [#allocation2], 16
    %932 = vst.msk [vmem:[%s931] sm:$0xf] %vm919, %v930
    %s933 = sld [smem:[#allocation8]]
    %v934 = vld [vmem:[#allocation2] sm:$0xf]
    %v935 = vstv %s933
    %v936 = vmul.f32 %v935, %v934
    %s937 = sld [smem:[#allocation8 + $0x1]]
    %v938 = vld [vmem:[%s922] sm:$0xf]
    %v939 = vstv %s937
    %v940 = vmul.f32 %v939, %v938
    %v941 = vadd.f32 %v936, %v940
    %s942 = sld [smem:[#allocation8 + $0x2]]
    %v943 = vld [vmem:[%s925] sm:$0xf]
    %v944 = vstv %s942
    %v945 = vmul.f32 %v944, %v943
    %v946 = vadd.f32 %v941, %v945
    %s947 = sld [smem:[#allocation8 + $0x3]]
    %v948 = vld [vmem:[%s928] sm:$0xf]
    %v949 = vstv %s947
    %v950 = vmul.f32 %v949, %v948
    %v951 = vadd.f32 %v946, %v950
    %s952 = sld [smem:[#allocation8 + $0x4]]
    %v953 = vld [vmem:[%s931] sm:$0xf]
    %v954 = vstv %s952
    %v955 = vmul.f32 %v954, %v953
    %v956 = vadd.f32 %v951, %v955
    %s957 = sld [smem:[#allocation8 + $0x5]]
    %v958 = vstv %s957
    %v959 = vmul.f32 %v958, %v934
    %s960 = sld [smem:[#allocation8 + $0x6]]
    %v961 = vstv %s960
    %v962 = vmul.f32 %v961, %v938
    %v963 = vadd.f32 %v959, %v962
    %s964 = sld [smem:[#allocation8 + $0x7]]
    %v965 = vstv %s964
    %v966 = vmul.f32 %v965, %v943
    %v967 = vadd.f32 %v963, %v966
    %s968 = sld [smem:[#allocation8 + $0x8]]
    %v969 = vstv %s968
    %v970 = vmul.f32 %v969, %v948
    %v971 = vadd.f32 %v967, %v970
    %s972 = sld [smem:[#allocation8 + $0x9]]
    %v973 = vstv %s972
    %v974 = vmul.f32 %v973, %v953
    %v975 = vadd.f32 %v971, %v974
    %s976 = sld [smem:[#allocation8 + $0xa]]
    %v977 = vstv %s976
    %v978 = vmul.f32 %v977, %v934
    %s979 = sld [smem:[#allocation8 + $0xb]]
    %v980 = vstv %s979
    %v981 = vmul.f32 %v980, %v938
    %v982 = vadd.f32 %v978, %v981
    %s983 = sld [smem:[#allocation8 + $0xc]]
    %v984 = vstv %s983
    %v985 = vmul.f32 %v984, %v943
    %v986 = vadd.f32 %v982, %v985
    %s987 = sld [smem:[#allocation8 + $0xd]]
    %v988 = vstv %s987
    %v989 = vmul.f32 %v988, %v948
    %v990 = vadd.f32 %v986, %v989
    %s991 = sld [smem:[#allocation8 + $0xe]]
    %v992 = vstv %s991
    %v993 = vmul.f32 %v992, %v953
    %v994 = vadd.f32 %v990, %v993
    %s995 = sld [smem:[#allocation8 + $0xf]]
    %v996 = vstv %s995
    %v997 = vmul.f32 %v996, %v934
    %s998 = sld [smem:[#allocation8 + $0x10]]
    %v999 = vstv %s998
    %v1000 = vmul.f32 %v999, %v938
    %v1001 = vadd.f32 %v997, %v1000
    %s1002 = sld [smem:[#allocation8 + $0x11]]
    %v1003 = vstv %s1002
    %v1004 = vmul.f32 %v1003, %v943
    %v1005 = vadd.f32 %v1001, %v1004
    %s1006 = sld [smem:[#allocation8 + $0x12]]
    %v1007 = vstv %s1006
    %v1008 = vmul.f32 %v1007, %v948
    %v1009 = vadd.f32 %v1005, %v1008
    %s1010 = sld [smem:[#allocation8 + $0x13]]
    %v1011 = vstv %s1010
    %v1012 = vmul.f32 %v1011, %v953
    %v1013 = vadd.f32 %v1009, %v1012
    %s1014 = sld [smem:[#allocation8 + $0x14]]
    %v1015 = vstv %s1014
    %v1016 = vmul.f32 %v1015, %v934
    %s1017 = sld [smem:[#allocation8 + $0x15]]
    %v1018 = vstv %s1017
    %v1019 = vmul.f32 %v1018, %v938
    %v1020 = vadd.f32 %v1016, %v1019
    %s1021 = sld [smem:[#allocation8 + $0x16]]
    %v1022 = vstv %s1021
    %v1023 = vmul.f32 %v1022, %v943
    %v1024 = vadd.f32 %v1020, %v1023
    %s1025 = sld [smem:[#allocation8 + $0x17]]
    %v1026 = vstv %s1025
    %v1027 = vmul.f32 %v1026, %v948
    %v1028 = vadd.f32 %v1024, %v1027
    %s1029 = sld [smem:[#allocation8 + $0x18]]
    %v1030 = vstv %s1029
    %v1031 = vmul.f32 %v1030, %v953
    %v1032 = vadd.f32 %v1028, %v1031
    %s1033 = sld [smem:[#allocation8 + $0x19]]
    %v1034 = vstv %s1033
    %v1035 = vmul.f32 %v1034, %v934
    %s1036 = sld [smem:[#allocation8 + $0x1a]]
    %v1037 = vstv %s1036
    %v1038 = vmul.f32 %v1037, %v938
    %v1039 = vadd.f32 %v1035, %v1038
    %s1040 = sld [smem:[#allocation8 + $0x1b]]
    %v1041 = vstv %s1040
    %v1042 = vmul.f32 %v1041, %v943
    %v1043 = vadd.f32 %v1039, %v1042
    %s1044 = sld [smem:[#allocation8 + $0x1c]]
    %v1045 = vstv %s1044
    %v1046 = vmul.f32 %v1045, %v948
    %v1047 = vadd.f32 %v1043, %v1046
    %s1048 = sld [smem:[#allocation8 + $0x1d]]
    %v1049 = vstv %s1048
    %v1050 = vmul.f32 %v1049, %v953
    %v1051 = vadd.f32 %v1047, %v1050
    %1053 = vrot.lane.b32.xlu0 %v975, 127
    %v1054 = vpop.permute.xlu0 %1053
    %v1055 = vrot.slane %v1054, 2
    %v1056 = vsel %vm180, %v1054, %v1055
    %v1058 = vadd.f32 %v956, %v1056
    %1060 = vrot.lane.b32.xlu0 %v1013, 127
    %v1061 = vpop.permute.xlu0 %1060
    %v1062 = vrot.slane %v1061, 2
    %v1063 = vsel %vm180, %v1061, %v1062
    %v1065 = vadd.f32 %v994, %v1063
    %1067 = vrot.lane.b32.xlu0 %v1065, 126
    %v1068 = vpop.permute.xlu0 %1067
    %v1069 = vrot.slane %v1068, 2
    %vm1070 = vcmask 1031168
    %v1071 = vsel %vm1070, %v1068, %v1069
    %v1073 = vadd.f32 %v1058, %v1071
    %1075 = vrot.lane.b32.xlu0 %v1051, 127
    %v1076 = vpop.permute.xlu0 %1075
    %v1077 = vrot.slane %v1076, 2
    %v1078 = vsel %vm180, %v1076, %v1077
    %v1080 = vadd.f32 %v1032, %v1078
    %1082 = vrot.lane.b32.xlu0 %v1080, 124
    %v1083 = vpop.permute.xlu0 %1082
    %v1084 = vrot.slane %v1083, 2
    %vm1085 = vcmask 1014784
    %v1086 = vsel %vm1085, %v1083, %v1084
    %v1088 = vadd.f32 %v1073, %v1086
    %s1089 = sld [smem:[#allocation4]]
    %v1090 = vstv %s1089
    %v1091 = vadd.f32 %v1088, %v1090
    %v1092 = vmax.f32 %v1091, 0.0
    %v1093 = vld [vmem:[%s5] sm:$0xff]
    %v1094 = vld [vmem:[%s5 + $0x8] sm:$0xff]
    %v1095 = vld [vmem:[%s5 + $0x10] sm:$0xff]
    %v1096 = vld [vmem:[%s5 + $0x18] sm:$0xff]
    %v1097 = vld [vmem:[%s5 + $0x20] sm:$0xff]
    %v1098 = vld [vmem:[%s5 + $0x28] sm:$0xff]
    %v1099 = vld [vmem:[%s5 + $0x30] sm:$0xff]
    %v1100 = vld [vmem:[%s5 + $0x38] sm:$0xff]
    %v1101 = vld [vmem:[%s5 + $0x40] sm:$0xff]
    %v1102 = vld [vmem:[%s5 + $0x48] sm:$0xff]
    %v1103 = vld [vmem:[%s5 + $0x50] sm:$0xff]
    %v1104 = vld [vmem:[%s5 + $0x58] sm:$0xff]
    %v1105 = vld [vmem:[%s5 + $0x60] sm:$0xff]
    %v1106 = vld [vmem:[%s5 + $0x68] sm:$0xff]
    %v1107 = vld [vmem:[%s5 + $0x70] sm:$0xff]
    %v1108 = vld [vmem:[%s5 + $0x78] sm:$0xff]
    %v1109 = vld [vmem:[%s5 + $0x80] sm:$0xff]
    %v1110 = vld [vmem:[%s5 + $0x88] sm:$0xff]
    %v1111 = vld [vmem:[%s5 + $0x90] sm:$0xff]
    %v1112 = vld [vmem:[%s5 + $0x98] sm:$0xff]
    %v1113 = vld [vmem:[%s5 + $0xa0] sm:$0xff]
    %v1114 = vld [vmem:[%s5 + $0xa8] sm:$0xff]
    %v1115 = vld [vmem:[%s5 + $0xb0] sm:$0xff]
    %v1116 = vld [vmem:[%s5 + $0xb8] sm:$0xff]
    %v1117 = vld [vmem:[%s5 + $0xc0] sm:$0xff]
    %v1118 = vld [vmem:[%s5 + $0xc8] sm:$0xff]
    %v1119 = vld [vmem:[%s5 + $0xd0] sm:$0xff]
    %v1120 = vld [vmem:[%s5 + $0xd8] sm:$0xff]
    %v1121 = vld [vmem:[%s5 + $0xe0] sm:$0xff]
    %v1122 = vld [vmem:[%s5 + $0xe8] sm:$0x3]
    %v1123 = vld [vmem:[%s6] sm:$0x1]
    %v1125 = vperm.slane %v1123, 0
    %1128 = vst [vmem:[#allocation1] ss:$4 sm:$0xff] %v1092
    %v1129 = vld.sshfl [vmem:[#allocation1] sm:$0xff pattern:$0x73625140]
    %v1130 = vld.sshfl [vmem:[#allocation1 + $0x8] sm:$0xff pattern:$0x73625140]
    %vm1132 = vcmask 867328
    %v1133 = vsel %vm1132, %v1130, 0
    %v1136 = vsel %vm917, %v1122, 0
    %1138 = vmatpush.msra.mxu0 %v1108
    %1139 = vmatpush.msra.mxu0 %v1107
    %1140 = vmatpush.msra.mxu0 %v1106
    %1141 = vmatpush.msra.mxu0 %v1105
    %1142 = vmatpush.msra.mxu0 %v1104
    %1143 = vmatpush.msra.mxu0 %v1103
    %1144 = vmatpush.msra.mxu0 %v1102
    %1145 = vmatpush.msra.mxu0 %v1101
    %1146 = vmatpush.msra.mxu0 %v1100
    %1147 = vmatpush.msra.mxu0 %v1099
    %1148 = vmatpush.msra.mxu0 %v1098
    %1149 = vmatpush.msra.mxu0 %v1097
    %1150 = vmatpush.msra.mxu0 %v1096
    %1151 = vmatpush.msra.mxu0 %v1095
    %1152 = vmatpush.msra.mxu0 %v1094
    %1153 = vmatpush.msra.mxu0 %v1093
    %1154 = vmatmul.f32.gmra.mxu0 %v1129
    %v1155 = vpop.f32.mrf.mxu0
    %v1156 = vadd.f32 %v1125, %v1155
    %1157 = vdwg.mxu0
    %1158 = vmatpush.msra.mxu0 0.0
    %1159 = vmatpush.msra.mxu0 0.0
    %1160 = vmatpush.msra.mxu0 %v1136
    %1161 = vmatpush.msra.mxu0 %v1121
    %1162 = vmatpush.msra.mxu0 %v1120
    %1163 = vmatpush.msra.mxu0 %v1119
    %1164 = vmatpush.msra.mxu0 %v1118
    %1165 = vmatpush.msra.mxu0 %v1117
    %1166 = vmatpush.msra.mxu0 %v1116
    %1167 = vmatpush.msra.mxu0 %v1115
    %1168 = vmatpush.msra.mxu0 %v1114
    %1169 = vmatpush.msra.mxu0 %v1113
    %1170 = vmatpush.msra.mxu0 %v1112
    %1171 = vmatpush.msra.mxu0 %v1111
    %1172 = vmatpush.msra.mxu0 %v1110
    %1173 = vmatpush.msra.mxu0 %v1109
    %1174 = vmatmul.f32.gmra.mxu0 %v1133
    %v1175 = vpop.f32.mrf.mxu0
    %v1176 = vadd.f32 %v1156, %v1175
    %1177 = vdwg.mxu0
    %vm1178 = vcmask 33792
    %1179 = vst.msk [vmem:[#allocation10] sm:$0x3] %vm1178, %v1176
    // Predicated region
    $region38: #{tpu_custom_call.1} parent=1 // pred_check
      _
    $region39: #{tpu_custom_call.1} parent=1 // pred_check_branch
      %1181 = sbr.rel (0) target = $region41
    $region40: #{tpu_custom_call.1} parent=1 // pred_region
      %1183 = vsyncadd [#allocation6], 0
      %s1185 = sshll.u32 [#allocation10], 4
      %s1186 = int_to_ptr.vmem [resolvable:$true] %s1185
      %s1187 = sshll.u32 %s7, 4
      %s1188 = int_to_ptr.hbm [resolvable:$true] %s1187
      %1190 = dma.vmem_to_hbm [thread:$0]  %s1186, 32, %s1188, [#allocation6]
    $region41: #{tpu_custom_call.1} parent=1 // pred_fallthru
      _
    // Predicated region
    $region42: #{tpu_custom_call.1} parent=1 // pred_check
      _
    $region43: #{tpu_custom_call.1} parent=1 // pred_check_branch
      %1192 = sbr.rel (0) target = $region45
    $region44: #{tpu_custom_call.1} parent=1 // pred_region
      %1194 = dma.done [#allocation6], 32
    $region45: #{tpu_custom_call.1} parent=1 // pred_fallthru
      _
    %1195 = vsyncpa [#allocation6], 1
    %1196 = vsyncpa [#allocation7], 1
    %1197 = vsyncpa [#allocation9], 1

</llo_original>
